<compile_context>
chip_gen: v7x
topology: tpu7x:2x2x1
jax: 0.10.0
libtpu: 0.0.40
codegen_flags: <defaults>
</compile_context>

<pallas_src>
import jax
import jax.numpy as jnp
from jax.experimental import pallas as pl
from jax.experimental.pallas import tpu as pltpu

IN_DIM = 784
HID_DIM = 500          # logical hidden size (PyTorch module)
HID_PAD = 512          # lane-dense padded hidden size (4 * 128)
OUT_DIM = 10           # logical number of classes
OUT_PAD = 128          # lane-dense padded output size
NEG_PAD = -1e30        # bias value for padded logit columns (exp -> 0)


def _round_up(n, m):
    return ((n + m - 1) // m) * m


def net_kernel(x_ref, w1_ref, b1_ref, w2_ref, b2_ref, o_ref):
    # x:  [TM, 784] f32 (cast to bf16 here, hidden under the MXU)
    # w1: [784, 512] bf16   b1: [1, 512] f32
    # w2: [512, 128] bf16   b2: [1, 128] f32 (cols 10.. are -1e30)
    # o:  [TM, 128] f32
    x = x_ref[...].astype(jnp.bfloat16)

    # hidden_layer + ReLU (f32 accumulation on MXU, f32 elementwise)
    h = jnp.dot(x, w1_ref[...], preferred_element_type=jnp.float32)
    h = jnp.maximum(h + b1_ref[...], 0.0)

    # output_layer (bf16 activations into the MXU, f32 accumulate + bias)
    z = jnp.dot(h.astype(jnp.bfloat16), w2_ref[...],
                preferred_element_type=jnp.float32) + b2_ref[...]

    # log_softmax over dim=1, lane-dense over 128 columns. Padded columns
    # carry logits of ~-1e30: they never win the max and exp() underflows to
    # exactly 0, so the result over the real 10 columns is exact.
    m = jnp.max(z, axis=-1, keepdims=True)
    s = z - m
    lse = jnp.log(jnp.sum(jnp.exp(s), axis=-1, keepdims=True))
    o_ref[...] = (s - lse).astype(o_ref.dtype)


def net_forward(x, w1, b1, w2, b2, *, tm=512):
    """x: [B, 784] f32. w1:[784,512] bf16, b1:[1,512] f32,
    w2:[512,128] bf16, b2:[1,128] f32 (see init_params).
    Returns [B, 10] f32 log-probs."""
    B, K = x.shape
    H = w1.shape[1]      # 512
    NP = w2.shape[1]     # 128 (padded output width)

    # Batch tile: multiple of 16 (bf16 row packing), sized so the grid has
    # >= ~4 steps (keeps both v7x TensorCores busy), capped at `tm` (default
    # 512) so large batches get few, fat, pipeline-friendly steps.
    tm = max(16, min(tm, _round_up(pl.cdiv(B, 4), 16)))
    grid = (pl.cdiv(B, tm),)   # ragged tail handled by masked edge blocks

    out = pl.pallas_call(
        net_kernel,
        out_shape=jax.ShapeDtypeStruct((B, NP), jnp.float32),
        grid=grid,
        in_specs=[
            # x tile streams with the grid (software pipelined), stays f32.
            pl.BlockSpec((tm, K), lambda i: (i, 0)),
            # Weights / biases: constant block index -> loaded once, resident.
            pl.BlockSpec((K, H), lambda i: (0, 0)),
            pl.BlockSpec((1, H), lambda i: (0, 0)),
            pl.BlockSpec((H, NP), lambda i: (0, 0)),
            pl.BlockSpec((1, NP), lambda i: (0, 0)),
        ],
        out_specs=pl.BlockSpec((tm, NP), lambda i: (i, 0)),
        compiler_params=pltpu.CompilerParams(
            dimension_semantics=("parallel",)),
    )(x, w1, b1, w2, b2)

    # Drop the 118 padded logit columns.
    return out[:, :OUT_DIM]


def init_params(key):
    """Deterministic init mimicking nn.Linear's U(-1/sqrt(fan_in), +...),
    with the hidden dim zero-padded 500 -> 512, the output dim padded
    10 -> 128 (zero weight columns, -1e30 bias entries), and weights stored
    bf16, pre-transposed as [in, out]."""
    k1, k2, k3, k4 = jax.random.split(key, 4)
    bound1 = 1.0 / jnp.sqrt(float(IN_DIM))
    bound2 = 1.0 / jnp.sqrt(float(HID_DIM))

    w1 = jax.random.uniform(k1, (IN_DIM, HID_DIM), jnp.float32, -bound1, bound1)
    b1 = jax.random.uniform(k2, (1, HID_DIM), jnp.float32, -bound1, bound1)
    w2 = jax.random.uniform(k3, (HID_DIM, OUT_DIM), jnp.float32, -bound2, bound2)
    b2 = jax.random.uniform(k4, (1, OUT_DIM), jnp.float32, -bound2, bound2)

    hpad = HID_PAD - HID_DIM
    opad = OUT_PAD - OUT_DIM

    # Hidden pad: extra hidden units output relu(0)=0 and their w2 rows are 0.
    w1 = jnp.pad(w1, ((0, 0), (0, hpad))).astype(jnp.bfloat16)
    b1 = jnp.pad(b1, ((0, 0), (0, hpad)))                       # f32
    # Output pad: zero weight columns, -1e30 bias -> padded logits vanish in
    # the softmax max/sum.
    w2 = jnp.pad(w2, ((0, hpad), (0, opad))).astype(jnp.bfloat16)
    b2 = jnp.pad(b2, ((0, 0), (0, opad)), constant_values=NEG_PAD)  # f32
    return w1, b1, w2, b2


def _reference(x, w1, b1, w2, b2):
    """Pure-JAX reference on the logical (unpadded) parameters with the same
    bf16-input / f32-accumulate matmuls as the kernel."""
    w1l, b1l = w1[:, :HID_DIM], b1[:, :HID_DIM]
    w2l, b2l = w2[:HID_DIM, :OUT_DIM], b2[:, :OUT_DIM]
    xb = x.astype(jnp.bfloat16)
    h = jnp.maximum(
        jnp.dot(xb, w1l, preferred_element_type=jnp.float32) + b1l, 0.0)
    z = jnp.dot(h.astype(jnp.bfloat16), w2l,
                preferred_element_type=jnp.float32) + b2l
    return jax.nn.log_softmax(z, axis=1)


if __name__ == "__main__":
    key = jax.random.PRNGKey(0)
    kx, kp = jax.random.split(key)

    # B=512 -> tm=128, grid=(4,): exercises the pipelined batch grid and
    # gives both v7x TensorCores >= 2 tiles each.
    B = 512
    x = jax.random.normal(kx, (B, IN_DIM), jnp.float32)
    w1, b1, w2, b2 = init_params(kp)

    out = jax.block_until_ready(net_forward(x, w1, b1, w2, b2))
    ref = _reference(x, w1, b1, w2, b2)
    assert out.shape == (B, OUT_DIM)
    assert jnp.allclose(out, ref, atol=2e-3, rtol=2e-3)

    # Ragged small batch exercises the masked edge-block path (no jnp.pad).
    B2 = 19
    out2 = jax.block_until_ready(net_forward(x[:B2], w1, b1, w2, b2))
    assert out2.shape == (B2, OUT_DIM)
    assert jnp.allclose(out2, _reference(x[:B2], w1, b1, w2, b2),
                        atol=2e-3, rtol=2e-3)

    print("KERNEL_OK")
</pallas_src>

<mosaic_0001>
module attributes {stable_mosaic.version = 11 : i64} {
  func.func @net_kernel(%arg0: i32, %arg1: memref<128x784xf32, #tpu.memory_space<vmem>>, %arg2: memref<784x512xbf16, #tpu.memory_space<vmem>>, %arg3: memref<1x512xf32, #tpu.memory_space<vmem>>, %arg4: memref<512x128xbf16, #tpu.memory_space<vmem>>, %arg5: memref<1x128xf32, #tpu.memory_space<vmem>>, %arg6: memref<128x128xf32, #tpu.memory_space<vmem>>) attributes {dimension_semantics = [#tpu.dimension_semantics<parallel>], iteration_bounds = array<i64: 4>, scalar_prefetch = 0 : i64, scratch_operands = 0 : i64, tpu.core_type = #tpu.core_type<tc>, window_params = [{transform_indices = @transform_0, window_bounds = array<i64: 128, 784>}, {pipeline_mode = #tpu.pipeline_mode<synchronous>, transform_indices = @transform_1, window_bounds = array<i64: 784, 512>}, {pipeline_mode = #tpu.pipeline_mode<synchronous>, transform_indices = @transform_2, window_bounds = array<i64: 1, 512>}, {pipeline_mode = #tpu.pipeline_mode<synchronous>, transform_indices = @transform_3, window_bounds = array<i64: 512, 128>}, {pipeline_mode = #tpu.pipeline_mode<synchronous>, transform_indices = @transform_4, window_bounds = array<i64: 1, 128>}, {transform_indices = @transform_5, window_bounds = array<i64: 128, 128>}]} {
    %c0 = arith.constant 0 : index
    %c0_0 = arith.constant 0 : index
    %0 = vector.load %arg1[%c0, %c0_0] : memref<128x784xf32, #tpu.memory_space<vmem>>, vector<128x784xf32>
    %1 = arith.truncf %0 : vector<128x784xf32> to vector<128x784xbf16>
    %c0_1 = arith.constant 0 : index
    %c0_2 = arith.constant 0 : index
    %2 = vector.load %arg2[%c0_1, %c0_2] : memref<784x512xbf16, #tpu.memory_space<vmem>>, vector<784x512xbf16>
    %cst = arith.constant dense<0.000000e+00> : vector<128x512xf32>
    %3 = tpu.matmul %1, %2, %cst {dimension_numbers = #tpu.dot_dimension_numbers<[1], [0], [0], [1], [0, 0, 1, 1], [], []>} : vector<128x784xbf16>, vector<784x512xbf16>, vector<128x512xf32> -> vector<128x512xf32>
    %c0_3 = arith.constant 0 : index
    %c0_4 = arith.constant 0 : index
    %4 = vector.load %arg3[%c0_3, %c0_4] : memref<1x512xf32, #tpu.memory_space<vmem>>, vector<1x512xf32>
    %5 = vector.broadcast %4 : vector<1x512xf32> to vector<128x512xf32>
    %6 = arith.addf %3, %5 : vector<128x512xf32>
    %cst_5 = arith.constant 0.000000e+00 : f32
    %7 = vector.broadcast %cst_5 : f32 to vector<128x512xf32>
    %8 = arith.maximumf %6, %7 : vector<128x512xf32>
    %9 = arith.truncf %8 : vector<128x512xf32> to vector<128x512xbf16>
    %c0_6 = arith.constant 0 : index
    %c0_7 = arith.constant 0 : index
    %10 = vector.load %arg4[%c0_6, %c0_7] : memref<512x128xbf16, #tpu.memory_space<vmem>>, vector<512x128xbf16>
    %cst_8 = arith.constant dense<0.000000e+00> : vector<128x128xf32>
    %11 = tpu.matmul %9, %10, %cst_8 {dimension_numbers = #tpu.dot_dimension_numbers<[1], [0], [0], [1], [0, 0, 1, 1], [], []>} : vector<128x512xbf16>, vector<512x128xbf16>, vector<128x128xf32> -> vector<128x128xf32>
    %c0_9 = arith.constant 0 : index
    %c0_10 = arith.constant 0 : index
    %12 = vector.load %arg5[%c0_9, %c0_10] : memref<1x128xf32, #tpu.memory_space<vmem>>, vector<1x128xf32>
    %13 = vector.broadcast %12 : vector<1x128xf32> to vector<128x128xf32>
    %14 = arith.addf %11, %13 : vector<128x128xf32>
    %cst_11 = arith.constant dense<0xFF800000> : vector<128xf32>
    %15 = vector.multi_reduction <maximumf>, %14, %cst_11 [1] : vector<128x128xf32> to vector<128xf32>
    %16 = vector.shape_cast %15 : vector<128xf32> to vector<128x1xf32>
    %17 = vector.broadcast %16 : vector<128x1xf32> to vector<128x128xf32>
    %18 = arith.subf %14, %17 : vector<128x128xf32>
    %19 = math.exp %18 : vector<128x128xf32>
    %cst_12 = arith.constant dense<0.000000e+00> : vector<128xf32>
    %20 = vector.multi_reduction <add>, %19, %cst_12 [1] : vector<128x128xf32> to vector<128xf32>
    %21 = vector.shape_cast %20 : vector<128xf32> to vector<128x1xf32>
    %22 = math.log %21 : vector<128x1xf32>
    %23 = vector.broadcast %22 : vector<128x1xf32> to vector<128x128xf32>
    %24 = arith.subf %18, %23 : vector<128x128xf32>
    %c0_13 = arith.constant 0 : index
    %c0_14 = arith.constant 0 : index
    %25 = vector.load %arg6[%c0_13, %c0_14] : memref<128x128xf32, #tpu.memory_space<vmem>>, vector<128x128xf32>
    tpu.vector_store %arg6[%c0_13, %c0_14], %24 {strides = array<i32>} : memref<128x128xf32, #tpu.memory_space<vmem>>, vector<128x128xf32>,
    return
  }
  func.func @transform_0(%arg0: i32) -> (i32, i32) {
    %c0_i32 = arith.constant 0 : i32
    %c0_i32_0 = arith.constant 0 : i32
    return %arg0, %c0_i32 : i32, i32
  }
  func.func @transform_1(%arg0: i32) -> (i32, i32) {
    %c0_i32 = arith.constant 0 : i32
    %c0_i32_0 = arith.constant 0 : i32
    %c0_i32_1 = arith.constant 0 : i32
    return %c0_i32, %c0_i32_0 : i32, i32
  }
  func.func @transform_2(%arg0: i32) -> (i32, i32) {
    %c0_i32 = arith.constant 0 : i32
    %c0_i32_0 = arith.constant 0 : i32
    %c0_i32_1 = arith.constant 0 : i32
    return %c0_i32, %c0_i32_0 : i32, i32
  }
  func.func @transform_3(%arg0: i32) -> (i32, i32) {
    %c0_i32 = arith.constant 0 : i32
    %c0_i32_0 = arith.constant 0 : i32
    %c0_i32_1 = arith.constant 0 : i32
    return %c0_i32, %c0_i32_0 : i32, i32
  }
  func.func @transform_4(%arg0: i32) -> (i32, i32) {
    %c0_i32 = arith.constant 0 : i32
    %c0_i32_0 = arith.constant 0 : i32
    %c0_i32_1 = arith.constant 0 : i32
    return %c0_i32, %c0_i32_0 : i32, i32
  }
  func.func @transform_5(%arg0: i32) -> (i32, i32) {
    %c0_i32 = arith.constant 0 : i32
    %c0_i32_0 = arith.constant 0 : i32
    return %arg0, %c0_i32 : i32, i32
  }
}

</mosaic_0001>

<llo_original>
// kernel: tpu_custom_call.1
$region0: #{tpu_custom_call.1}
  #allocation0 [shape = 'u32[]', space=smem, size = 0x4, offset = 0x4, fixed_abs, tag = 'smem constant byte address 0x4 - core index']
  #allocation1 [shape = 'u32[144,128]{1,0:T(1,128)}', space=vmem, size = 0x12000, scoped, tag = 'internal scratch']
  %s0 = inlined_call_operand.vmem [shape: f32[512,784], index: 0, kind: input, shape index: {}]
  %s1 = inlined_call_operand.vmem [shape: bf16[784,512], index: 1, kind: input, shape index: {}]
  %s2 = inlined_call_operand.vmem [shape: f32[1,512], index: 2, kind: input, shape index: {}]
  %s3 = inlined_call_operand.vmem [shape: bf16[512,128], index: 3, kind: input, shape index: {}]
  %s4 = inlined_call_operand.vmem [shape: f32[1,128], index: 4, kind: input, shape index: {}]
  %s5 = inlined_call_operand.hbm [shape: f32[512,128], index: 5, kind: output, shape index: {}]
  %s6 = sld [smem:[#allocation0]]
  $region53: #{tpu_custom_call.1} parent=0
    _
  %s8 = ssub.s32 1, %s6
  %s9 = scalar_select 0, %s8, %s6
  $region1: #{tpu_custom_call.1} parent=0
    #allocation2 [shape = 'u8[131072]{0}', space=vmem, size = 0x20000, scoped, tag = 'output window, operand 0']
    #allocation3 [shape = 's32[2]{0}', space=sflag, size = 0x8, scoped, tag = 'scoped memory for tpu_custom_call.1']
    %10 = vsyncpa [#allocation3], 0
    %s11 = scalar_lea.sflag [#allocation3], 1
    %12 = vsyncpa %s11, 0
    loop: start=0, step=1, limit=6
    $region2: #{tpu_custom_call.1} parent=1 // loop_pre_header
      _
    $region3: #{tpu_custom_call.1} parent=1 // loop_header
      %s14 = sphi 0, %s18
      %p15 = scmp.ge.s32.totalorder %s14, 6
      %s24 = sphi 0, %s26
      %s27 = sphi 0, %s24
      %s28 = sphi 0, %s27
      %s44 = sphi 0, %s28
      %s48 = sphi 0, %s48
      %s50 = sphi 0, %s48
      %s51 = sphi 0, %s50
      %s65 = sphi 0, %s51
      %s69 = sphi 0, %s69
      %s71 = sphi 0, %s69
      %s72 = sphi 0, %s71
      %s86 = sphi 0, %s72
      %s90 = sphi 0, %s90
      %s92 = sphi 0, %s90
      %s93 = sphi 0, %s92
      %s107 = sphi 0, %s93
      %s111 = sphi 0, %s111
      %s113 = sphi 0, %s111
      %s114 = sphi 0, %s113
      %s128 = sphi 0, %s114
      %s134 = sphi 0, %s136
      %s137 = sphi 0, %s134
      %s138 = sphi 0, %s137
      %s154 = sphi 0, %s138
    $region4: #{tpu_custom_call.1} parent=1 // loop_header_branch
      %17 = sbr.rel (%p15) target = $region8
    $region5: #{tpu_custom_call.1} parent=1 // loop_body
      %s19 = ssub.s32 %s14, 1
      %s20 = ssub.s32 %s14, 2
      %s21 = sadd.s32 %s14, 1
      %s22 = ssub.s32 %s14, %s21
      %p23 = scmp.eq.s32.totalorder %s22, 0
      %s25 = sadd.s32 %s24, 1
      %s26 = scalar_select %p23, %s24, %s25
      %p29 = pneg %p23
      %p30 = scmp.eq.s32.totalorder %s14, 3
      %p31 = por %p29, %p30
      %p32 = scmp.ne.s32.totalorder %s24, %s27
      %p33 = scmp.eq.s32.totalorder %s14, 0
      %p34 = por %p32, %p33
      %p35 = scmp.ne.s32.totalorder %s24, %s27
      %p36 = scmp.eq.s32.totalorder %s19, 3
      %p37 = por %p35, %p36
      %p38 = scmp.ne.s32.totalorder %s27, %s28
      %p39 = scmp.eq.s32.totalorder %s19, 0
      %p40 = por %p38, %p39
      %p41 = scmp.ne.s32.totalorder %s27, %s28
      %p42 = scmp.eq.s32.totalorder %s20, 3
      %p43 = por %p41, %p42
      %p45 = scmp.ne.s32.totalorder %s28, %s44
      %p46 = scmp.eq.s32.totalorder %s20, 0
      %p47 = por %p45, %p46
      %s49 = sadd.s32 %s48, 1
      %p52 = scmp.eq.s32.totalorder %s14, 3
      %p53 = scmp.ne.s32.totalorder %s48, %s50
      %p54 = scmp.eq.s32.totalorder %s14, 0
      %p55 = por %p53, %p54
      %p56 = scmp.ne.s32.totalorder %s48, %s50
      %p57 = scmp.eq.s32.totalorder %s19, 3
      %p58 = por %p56, %p57
      %p59 = scmp.ne.s32.totalorder %s50, %s51
      %p60 = scmp.eq.s32.totalorder %s19, 0
      %p61 = por %p59, %p60
      %p62 = scmp.ne.s32.totalorder %s50, %s51
      %p63 = scmp.eq.s32.totalorder %s20, 3
      %p64 = por %p62, %p63
      %p66 = scmp.ne.s32.totalorder %s51, %s65
      %p67 = scmp.eq.s32.totalorder %s20, 0
      %p68 = por %p66, %p67
      %s70 = sadd.s32 %s69, 1
      %p73 = scmp.eq.s32.totalorder %s14, 3
      %p74 = scmp.ne.s32.totalorder %s69, %s71
      %p75 = scmp.eq.s32.totalorder %s14, 0
      %p76 = por %p74, %p75
      %p77 = scmp.ne.s32.totalorder %s69, %s71
      %p78 = scmp.eq.s32.totalorder %s19, 3
      %p79 = por %p77, %p78
      %p80 = scmp.ne.s32.totalorder %s71, %s72
      %p81 = scmp.eq.s32.totalorder %s19, 0
      %p82 = por %p80, %p81
      %p83 = scmp.ne.s32.totalorder %s71, %s72
      %p84 = scmp.eq.s32.totalorder %s20, 3
      %p85 = por %p83, %p84
      %p87 = scmp.ne.s32.totalorder %s72, %s86
      %p88 = scmp.eq.s32.totalorder %s20, 0
      %p89 = por %p87, %p88
      %s91 = sadd.s32 %s90, 1
      %p94 = scmp.eq.s32.totalorder %s14, 3
      %p95 = scmp.ne.s32.totalorder %s90, %s92
      %p96 = scmp.eq.s32.totalorder %s14, 0
      %p97 = por %p95, %p96
      %p98 = scmp.ne.s32.totalorder %s90, %s92
      %p99 = scmp.eq.s32.totalorder %s19, 3
      %p100 = por %p98, %p99
      %p101 = scmp.ne.s32.totalorder %s92, %s93
      %p102 = scmp.eq.s32.totalorder %s19, 0
      %p103 = por %p101, %p102
      %p104 = scmp.ne.s32.totalorder %s92, %s93
      %p105 = scmp.eq.s32.totalorder %s20, 3
      %p106 = por %p104, %p105
      %p108 = scmp.ne.s32.totalorder %s93, %s107
      %p109 = scmp.eq.s32.totalorder %s20, 0
      %p110 = por %p108, %p109
      %s112 = sadd.s32 %s111, 1
      %p115 = scmp.eq.s32.totalorder %s14, 3
      %p116 = scmp.ne.s32.totalorder %s111, %s113
      %p117 = scmp.eq.s32.totalorder %s14, 0
      %p118 = por %p116, %p117
      %p119 = scmp.ne.s32.totalorder %s111, %s113
      %p120 = scmp.eq.s32.totalorder %s19, 3
      %p121 = por %p119, %p120
      %p122 = scmp.ne.s32.totalorder %s113, %s114
      %p123 = scmp.eq.s32.totalorder %s19, 0
      %p124 = por %p122, %p123
      %p125 = scmp.ne.s32.totalorder %s113, %s114
      %p126 = scmp.eq.s32.totalorder %s20, 3
      %p127 = por %p125, %p126
      %p129 = scmp.ne.s32.totalorder %s114, %s128
      %p130 = scmp.eq.s32.totalorder %s20, 0
      %p131 = por %p129, %p130
      %s132 = ssub.s32 %s14, %s21
      %p133 = scmp.eq.s32.totalorder %s132, 0
      %s135 = sadd.s32 %s134, 1
      %s136 = scalar_select %p133, %s134, %s135
      %p139 = pneg %p133
      %p140 = scmp.eq.s32.totalorder %s14, 3
      %p141 = por %p139, %p140
      %p142 = scmp.ne.s32.totalorder %s134, %s137
      %p143 = scmp.eq.s32.totalorder %s14, 0
      %p144 = por %p142, %p143
      %p145 = scmp.ne.s32.totalorder %s134, %s137
      %p146 = scmp.eq.s32.totalorder %s19, 3
      %p147 = por %p145, %p146
      %p148 = scmp.ne.s32.totalorder %s137, %s138
      %p149 = scmp.eq.s32.totalorder %s19, 0
      %p150 = por %p148, %p149
      %p151 = scmp.ne.s32.totalorder %s137, %s138
      %p152 = scmp.eq.s32.totalorder %s20, 3
      %p153 = por %p151, %p152
      %p155 = scmp.ne.s32.totalorder %s138, %s154
      %p156 = scmp.eq.s32.totalorder %s20, 0
      %p157 = por %p155, %p156
      %p158 = scmp.le.s32.totalorder 1, %s14
      %p159 = scmp.lt.s32.totalorder %s14, 5
      %p160 = pnand %p158, %p159
      %p161 = pneg %p160
      // Predicated region
      $region9: #{tpu_custom_call.1} parent=5 // pred_check
        _
      $region10: #{tpu_custom_call.1} parent=5 // pred_check_branch
        %163 = sbr.rel (%p160) target = $region12
      $region11: #{tpu_custom_call.1} parent=5 // pred_region
        %s164 = ssub.s32 %s14, 1
        // Predicated region
        $region13: #{tpu_custom_call.1} parent=11 // pred_check
          %p165 = pneg %p61
        $region14: #{tpu_custom_call.1} parent=11 // pred_check_branch
          %167 = sbr.rel (%p165) target = $region16
        $region15: #{tpu_custom_call.1} parent=11 // pred_region
          _
        $region16: #{tpu_custom_call.1} parent=11 // pred_fallthru
          _
        // Predicated region
        $region17: #{tpu_custom_call.1} parent=11 // pred_check
          %p168 = pneg %p82
        $region18: #{tpu_custom_call.1} parent=11 // pred_check_branch
          %170 = sbr.rel (%p168) target = $region20
        $region19: #{tpu_custom_call.1} parent=11 // pred_region
          _
        $region20: #{tpu_custom_call.1} parent=11 // pred_fallthru
          _
        // Predicated region
        $region21: #{tpu_custom_call.1} parent=11 // pred_check
          %p171 = pneg %p103
        $region22: #{tpu_custom_call.1} parent=11 // pred_check_branch
          %173 = sbr.rel (%p171) target = $region24
        $region23: #{tpu_custom_call.1} parent=11 // pred_region
          _
        $region24: #{tpu_custom_call.1} parent=11 // pred_fallthru
          _
        // Predicated region
        $region25: #{tpu_custom_call.1} parent=11 // pred_check
          %p174 = pneg %p124
        $region26: #{tpu_custom_call.1} parent=11 // pred_check_branch
          %176 = sbr.rel (%p174) target = $region28
        $region27: #{tpu_custom_call.1} parent=11 // pred_region
          _
        $region28: #{tpu_custom_call.1} parent=11 // pred_fallthru
          _
      $region12: #{tpu_custom_call.1} parent=5 // pred_fallthru
        _
      %p177 = scmp.lt.s32.totalorder %s14, 4
      // Predicated region
      $region29: #{tpu_custom_call.1} parent=5 // pred_check
        %p178 = pneg %p177
      $region30: #{tpu_custom_call.1} parent=5 // pred_check_branch
        %180 = sbr.rel (%p178) target = $region32
      $region31: #{tpu_custom_call.1} parent=5 // pred_region
        // Predicated region
        $region33: #{tpu_custom_call.1} parent=31 // pred_check
          %p181 = pneg %p34
        $region34: #{tpu_custom_call.1} parent=31 // pred_check_branch
          %183 = sbr.rel (%p181) target = $region36
        $region35: #{tpu_custom_call.1} parent=31 // pred_region
          %s184 = smul.u32 16, %s14
          %p185 = scmp.lt.s32.totalorder %s184, 63
          %s186 = scalar_select %p185, %s184, 63
          %s187 = smul.addr %s186, 7
          %s188 = smul.addr %s187, 8
          %s189 = scalar_lea.vmem %s0, %s188
          %s190 = smul.u32 16, %s14
        $region36: #{tpu_custom_call.1} parent=31 // pred_fallthru
          _
      $region32: #{tpu_custom_call.1} parent=5 // pred_fallthru
        _
      %p191 = scmp.le.s32.totalorder 1, %s14
      %p192 = scmp.lt.s32.totalorder %s14, 5
      %p193 = pnand %p191, %p192
      %p194 = pneg %p193
      // Predicated region
      $region37: #{tpu_custom_call.1} parent=5 // pred_check
        _
      $region38: #{tpu_custom_call.1} parent=5 // pred_check_branch
        %196 = sbr.rel (%p193) target = $region40
      $region39: #{tpu_custom_call.1} parent=5 // pred_region
        %s197 = ssub.s32 %s14, 1
        %s198 = smul.u32 16, %s19
        %p199 = scmp.lt.s32.totalorder %s198, 63
        %s200 = scalar_select %p199, %s198, 63
        %s201 = smul.addr %s200, 7
        %s202 = smul.addr %s201, 8
        %s203 = scalar_lea.vmem %s0, %s202
        %p204 = pneg %p40
        %p205 = pneg %p37
        %p206 = pneg %p61
        %p207 = pneg %p58
        %p208 = pneg %p82
        %p209 = pneg %p79
        %p210 = pneg %p103
        %p211 = pneg %p100
        %p212 = pneg %p124
        %p213 = pneg %p121
        %p214 = pneg %p150
        %p215 = pneg %p147
        %s216 = sand.u32 %s137, 1
        %s217 = scalar_lea.sflag [#allocation3], %s216
        %s218 = sand.u32 %s137, 1
        %s219 = smul.addr %s218, 128
        %s220 = scalar_lea.vmem [#allocation2], %s219
        %s221 = smul.u32 16, %s19
        %p222 = scmp.lt.s32.totalorder %s221, 63
        %s223 = scalar_select %p222, %s221, 63
        %s224 = smul.addr %s223, 7
        %s225 = smul.addr %s224, 8
        %s226 = scalar_lea.vmem %s0, %s225
        %s227 = smul.u32 16, %s19
        %s228 = smul.u32 16, %s19
        %v230 = vld [vmem:[%s226] sm:$0xff]
        %v231 = vld [vmem:[%s226 + $0x8] sm:$0xff]
        %v232 = vld [vmem:[%s226 + $0x10] sm:$0xff]
        %v233 = vld [vmem:[%s226 + $0x18] sm:$0xff]
        %v234 = vld [vmem:[%s226 + $0x20] sm:$0xff]
        %v235 = vld [vmem:[%s226 + $0x28] sm:$0xff]
        %v236 = vld [vmem:[%s226 + $0x30] sm:$0xff]
        %v237 = vld [vmem:[%s226 + $0x38] sm:$0xff]
        %v238 = vld [vmem:[%s226 + $0x40] sm:$0xff]
        %v239 = vld [vmem:[%s226 + $0x48] sm:$0xff]
        %v240 = vld [vmem:[%s226 + $0x50] sm:$0xff]
        %v241 = vld [vmem:[%s226 + $0x58] sm:$0xff]
        %v242 = vld [vmem:[%s226 + $0x60] sm:$0xff]
        %v243 = vld [vmem:[%s226 + $0x68] sm:$0xff]
        %v244 = vld [vmem:[%s226 + $0x70] sm:$0xff]
        %v245 = vld [vmem:[%s226 + $0x78] sm:$0xff]
        %v246 = vld [vmem:[%s226 + $0x80] sm:$0xff]
        %v247 = vld [vmem:[%s226 + $0x88] sm:$0xff]
        %v248 = vld [vmem:[%s226 + $0x90] sm:$0xff]
        %v249 = vld [vmem:[%s226 + $0x98] sm:$0xff]
        %v250 = vld [vmem:[%s226 + $0xa0] sm:$0xff]
        %v251 = vld [vmem:[%s226 + $0xa8] sm:$0xff]
        %v252 = vld [vmem:[%s226 + $0xb0] sm:$0xff]
        %v253 = vld [vmem:[%s226 + $0xb8] sm:$0xff]
        %v254 = vld [vmem:[%s226 + $0xc0] sm:$0xff]
        %v255 = vld [vmem:[%s226 + $0xc8] sm:$0xff]
        %v256 = vld [vmem:[%s226 + $0xd0] sm:$0xff]
        %v257 = vld [vmem:[%s226 + $0xd8] sm:$0xff]
        %v258 = vld [vmem:[%s226 + $0xe0] sm:$0xff]
        %v259 = vld [vmem:[%s226 + $0xe8] sm:$0xff]
        %v260 = vld [vmem:[%s226 + $0xf0] sm:$0xff]
        %v261 = vld [vmem:[%s226 + $0xf8] sm:$0xff]
        %v262 = vld [vmem:[%s226 + $0x100] sm:$0xff]
        %v263 = vld [vmem:[%s226 + $0x108] sm:$0xff]
        %v264 = vld [vmem:[%s226 + $0x110] sm:$0xff]
        %v265 = vld [vmem:[%s226 + $0x118] sm:$0xff]
        %v266 = vld [vmem:[%s226 + $0x120] sm:$0xff]
        %v267 = vld [vmem:[%s226 + $0x128] sm:$0xff]
        %v268 = vld [vmem:[%s226 + $0x130] sm:$0xff]
        %v269 = vld [vmem:[%s226 + $0x138] sm:$0xff]
        %v270 = vld [vmem:[%s226 + $0x140] sm:$0xff]
        %v271 = vld [vmem:[%s226 + $0x148] sm:$0xff]
        %v272 = vld [vmem:[%s226 + $0x150] sm:$0xff]
        %v273 = vld [vmem:[%s226 + $0x158] sm:$0xff]
        %v274 = vld [vmem:[%s226 + $0x160] sm:$0xff]
        %v275 = vld [vmem:[%s226 + $0x168] sm:$0xff]
        %v276 = vld [vmem:[%s226 + $0x170] sm:$0xff]
        %v277 = vld [vmem:[%s226 + $0x178] sm:$0xff]
        %v278 = vld [vmem:[%s226 + $0x180] sm:$0xff]
        %v279 = vld [vmem:[%s226 + $0x188] sm:$0xff]
        %v280 = vld [vmem:[%s226 + $0x190] sm:$0xff]
        %v281 = vld [vmem:[%s226 + $0x198] sm:$0xff]
        %v282 = vld [vmem:[%s226 + $0x1a0] sm:$0xff]
        %v283 = vld [vmem:[%s226 + $0x1a8] sm:$0xff]
        %v284 = vld [vmem:[%s226 + $0x1b0] sm:$0xff]
        %v285 = vld [vmem:[%s226 + $0x1b8] sm:$0xff]
        %v286 = vld [vmem:[%s226 + $0x1c0] sm:$0xff]
        %v287 = vld [vmem:[%s226 + $0x1c8] sm:$0xff]
        %v288 = vld [vmem:[%s226 + $0x1d0] sm:$0xff]
        %v289 = vld [vmem:[%s226 + $0x1d8] sm:$0xff]
        %v290 = vld [vmem:[%s226 + $0x1e0] sm:$0xff]
        %v291 = vld [vmem:[%s226 + $0x1e8] sm:$0xff]
        %v292 = vld [vmem:[%s226 + $0x1f0] sm:$0xff]
        %v293 = vld [vmem:[%s226 + $0x1f8] sm:$0xff]
        %v294 = vld [vmem:[%s226 + $0x200] sm:$0xff]
        %v295 = vld [vmem:[%s226 + $0x208] sm:$0xff]
        %v296 = vld [vmem:[%s226 + $0x210] sm:$0xff]
        %v297 = vld [vmem:[%s226 + $0x218] sm:$0xff]
        %v298 = vld [vmem:[%s226 + $0x220] sm:$0xff]
        %v299 = vld [vmem:[%s226 + $0x228] sm:$0xff]
        %v300 = vld [vmem:[%s226 + $0x230] sm:$0xff]
        %v301 = vld [vmem:[%s226 + $0x238] sm:$0xff]
        %v302 = vld [vmem:[%s226 + $0x240] sm:$0xff]
        %v303 = vld [vmem:[%s226 + $0x248] sm:$0xff]
        %v304 = vld [vmem:[%s226 + $0x250] sm:$0xff]
        %v305 = vld [vmem:[%s226 + $0x258] sm:$0xff]
        %v306 = vld [vmem:[%s226 + $0x260] sm:$0xff]
        %v307 = vld [vmem:[%s226 + $0x268] sm:$0xff]
        %v308 = vld [vmem:[%s226 + $0x270] sm:$0xff]
        %v309 = vld [vmem:[%s226 + $0x278] sm:$0xff]
        %v310 = vld [vmem:[%s226 + $0x280] sm:$0xff]
        %v311 = vld [vmem:[%s226 + $0x288] sm:$0xff]
        %v312 = vld [vmem:[%s226 + $0x290] sm:$0xff]
        %v313 = vld [vmem:[%s226 + $0x298] sm:$0xff]
        %v314 = vld [vmem:[%s226 + $0x2a0] sm:$0xff]
        %v315 = vld [vmem:[%s226 + $0x2a8] sm:$0xff]
        %v316 = vld [vmem:[%s226 + $0x2b0] sm:$0xff]
        %v317 = vld [vmem:[%s226 + $0x2b8] sm:$0xff]
        %v318 = vld [vmem:[%s226 + $0x2c0] sm:$0xff]
        %v319 = vld [vmem:[%s226 + $0x2c8] sm:$0xff]
        %v320 = vld [vmem:[%s226 + $0x2d0] sm:$0xff]
        %v321 = vld [vmem:[%s226 + $0x2d8] sm:$0xff]
        %v322 = vld [vmem:[%s226 + $0x2e0] sm:$0xff]
        %v323 = vld [vmem:[%s226 + $0x2e8] sm:$0xff]
        %v324 = vld [vmem:[%s226 + $0x2f0] sm:$0xff]
        %v325 = vld [vmem:[%s226 + $0x2f8] sm:$0xff]
        %v326 = vld [vmem:[%s226 + $0x300] sm:$0xff]
        %v327 = vld [vmem:[%s226 + $0x308] sm:$0xff]
        %v328 = vld [vmem:[%s226 + $0x310] sm:$0xff]
        %v329 = vld [vmem:[%s226 + $0x318] sm:$0xff]
        %v330 = vld [vmem:[%s226 + $0x320] sm:$0xff]
        %v331 = vld [vmem:[%s226 + $0x328] sm:$0xff]
        %v332 = vld [vmem:[%s226 + $0x330] sm:$0xff]
        %v333 = vld [vmem:[%s226 + $0x338] sm:$0xff]
        %v334 = vld [vmem:[%s226 + $0x340] sm:$0xff]
        %v335 = vld [vmem:[%s226 + $0x348] sm:$0xff]
        %v336 = vld [vmem:[%s226 + $0x350] sm:$0xff]
        %v337 = vld [vmem:[%s226 + $0x358] sm:$0xff]
        %v338 = vld [vmem:[%s226 + $0x360] sm:$0xff]
        %v339 = vld [vmem:[%s226 + $0x368] sm:$0xff]
        %v340 = vld [vmem:[%s226 + $0x370] sm:$0xff]
        %v341 = vld [vmem:[%s226 + $0x378] sm:$0xff]
        %v342 = vpack.c.bf16 %v237, %v230
        %v343 = vpack.c.bf16 %v238, %v231
        %v344 = vpack.c.bf16 %v239, %v232
        %v345 = vpack.c.bf16 %v240, %v233
        %v346 = vpack.c.bf16 %v241, %v234
        %v347 = vpack.c.bf16 %v242, %v235
        %v348 = vpack.c.bf16 %v243, %v236
        %v349 = vpack.c.bf16 %v251, %v244
        %v350 = vpack.c.bf16 %v252, %v245
        %v351 = vpack.c.bf16 %v253, %v246
        %v352 = vpack.c.bf16 %v254, %v247
        %v353 = vpack.c.bf16 %v255, %v248
        %v354 = vpack.c.bf16 %v256, %v249
        %v355 = vpack.c.bf16 %v257, %v250
        %v356 = vpack.c.bf16 %v265, %v258
        %v357 = vpack.c.bf16 %v266, %v259
        %v358 = vpack.c.bf16 %v267, %v260
        %v359 = vpack.c.bf16 %v268, %v261
        %v360 = vpack.c.bf16 %v269, %v262
        %v361 = vpack.c.bf16 %v270, %v263
        %v362 = vpack.c.bf16 %v271, %v264
        %v363 = vpack.c.bf16 %v279, %v272
        %v364 = vpack.c.bf16 %v280, %v273
        %v365 = vpack.c.bf16 %v281, %v274
        %v366 = vpack.c.bf16 %v282, %v275
        %v367 = vpack.c.bf16 %v283, %v276
        %v368 = vpack.c.bf16 %v284, %v277
        %v369 = vpack.c.bf16 %v285, %v278
        %v370 = vpack.c.bf16 %v293, %v286
        %v371 = vpack.c.bf16 %v294, %v287
        %v372 = vpack.c.bf16 %v295, %v288
        %v373 = vpack.c.bf16 %v296, %v289
        %v374 = vpack.c.bf16 %v297, %v290
        %v375 = vpack.c.bf16 %v298, %v291
        %v376 = vpack.c.bf16 %v299, %v292
        %v377 = vpack.c.bf16 %v307, %v300
        %v378 = vpack.c.bf16 %v308, %v301
        %v379 = vpack.c.bf16 %v309, %v302
        %v380 = vpack.c.bf16 %v310, %v303
        %v381 = vpack.c.bf16 %v311, %v304
        %v382 = vpack.c.bf16 %v312, %v305
        %v383 = vpack.c.bf16 %v313, %v306
        %v384 = vpack.c.bf16 %v321, %v314
        %v385 = vpack.c.bf16 %v322, %v315
        %v386 = vpack.c.bf16 %v323, %v316
        %v387 = vpack.c.bf16 %v324, %v317
        %v388 = vpack.c.bf16 %v325, %v318
        %v389 = vpack.c.bf16 %v326, %v319
        %v390 = vpack.c.bf16 %v327, %v320
        %v391 = vpack.c.bf16 %v335, %v328
        %v392 = vpack.c.bf16 %v336, %v329
        %v393 = vpack.c.bf16 %v337, %v330
        %v394 = vpack.c.bf16 %v338, %v331
        %v395 = vpack.c.bf16 %v339, %v332
        %v396 = vpack.c.bf16 %v340, %v333
        %v397 = vpack.c.bf16 %v341, %v334
        %v398 = vld [vmem:[%s1] sm:$0xff]
        %v399 = vld [vmem:[%s1 + $0x8] sm:$0xff]
        %v400 = vld [vmem:[%s1 + $0x10] sm:$0xff]
        %v401 = vld [vmem:[%s1 + $0x18] sm:$0xff]
        %v402 = vld [vmem:[%s1 + $0x20] sm:$0xff]
        %v403 = vld [vmem:[%s1 + $0x28] sm:$0xff]
        %v404 = vld [vmem:[%s1 + $0x30] sm:$0xff]
        %v405 = vld [vmem:[%s1 + $0x38] sm:$0xff]
        %v406 = vld [vmem:[%s1 + $0x40] sm:$0xff]
        %v407 = vld [vmem:[%s1 + $0x48] sm:$0xff]
        %v408 = vld [vmem:[%s1 + $0x50] sm:$0xff]
        %v409 = vld [vmem:[%s1 + $0x58] sm:$0xff]
        %v410 = vld [vmem:[%s1 + $0x60] sm:$0xff]
        %v411 = vld [vmem:[%s1 + $0x68] sm:$0xff]
        %v412 = vld [vmem:[%s1 + $0x70] sm:$0xff]
        %v413 = vld [vmem:[%s1 + $0x78] sm:$0xff]
        %v414 = vld [vmem:[%s1 + $0x80] sm:$0xff]
        %v415 = vld [vmem:[%s1 + $0x88] sm:$0xff]
        %v416 = vld [vmem:[%s1 + $0x90] sm:$0xff]
        %v417 = vld [vmem:[%s1 + $0x98] sm:$0xff]
        %v418 = vld [vmem:[%s1 + $0xa0] sm:$0xff]
        %v419 = vld [vmem:[%s1 + $0xa8] sm:$0xff]
        %v420 = vld [vmem:[%s1 + $0xb0] sm:$0xff]
        %v421 = vld [vmem:[%s1 + $0xb8] sm:$0xff]
        %v422 = vld [vmem:[%s1 + $0xc0] sm:$0xff]
        %v423 = vld [vmem:[%s1 + $0xc8] sm:$0xff]
        %v424 = vld [vmem:[%s1 + $0xd0] sm:$0xff]
        %v425 = vld [vmem:[%s1 + $0xd8] sm:$0xff]
        %v426 = vld [vmem:[%s1 + $0xe0] sm:$0xff]
        %v427 = vld [vmem:[%s1 + $0xe8] sm:$0xff]
        %v428 = vld [vmem:[%s1 + $0xf0] sm:$0xff]
        %v429 = vld [vmem:[%s1 + $0xf8] sm:$0xff]
        %v430 = vld [vmem:[%s1 + $0x100] sm:$0xff]
        %v431 = vld [vmem:[%s1 + $0x108] sm:$0xff]
        %v432 = vld [vmem:[%s1 + $0x110] sm:$0xff]
        %v433 = vld [vmem:[%s1 + $0x118] sm:$0xff]
        %v434 = vld [vmem:[%s1 + $0x120] sm:$0xff]
        %v435 = vld [vmem:[%s1 + $0x128] sm:$0xff]
        %v436 = vld [vmem:[%s1 + $0x130] sm:$0xff]
        %v437 = vld [vmem:[%s1 + $0x138] sm:$0xff]
        %v438 = vld [vmem:[%s1 + $0x140] sm:$0xff]
        %v439 = vld [vmem:[%s1 + $0x148] sm:$0xff]
        %v440 = vld [vmem:[%s1 + $0x150] sm:$0xff]
        %v441 = vld [vmem:[%s1 + $0x158] sm:$0xff]
        %v442 = vld [vmem:[%s1 + $0x160] sm:$0xff]
        %v443 = vld [vmem:[%s1 + $0x168] sm:$0xff]
        %v444 = vld [vmem:[%s1 + $0x170] sm:$0xff]
        %v445 = vld [vmem:[%s1 + $0x178] sm:$0xff]
        %v446 = vld [vmem:[%s1 + $0x180] sm:$0xff]
        %v447 = vld [vmem:[%s1 + $0x188] sm:$0xff]
        %v448 = vld [vmem:[%s1 + $0x190] sm:$0xff]
        %v449 = vld [vmem:[%s1 + $0x198] sm:$0xff]
        %v450 = vld [vmem:[%s1 + $0x1a0] sm:$0xff]
        %v451 = vld [vmem:[%s1 + $0x1a8] sm:$0xff]
        %v452 = vld [vmem:[%s1 + $0x1b0] sm:$0xff]
        %v453 = vld [vmem:[%s1 + $0x1b8] sm:$0xff]
        %v454 = vld [vmem:[%s1 + $0x1c0] sm:$0xff]
        %v455 = vld [vmem:[%s1 + $0x1c8] sm:$0xff]
        %v456 = vld [vmem:[%s1 + $0x1d0] sm:$0xff]
        %v457 = vld [vmem:[%s1 + $0x1d8] sm:$0xff]
        %v458 = vld [vmem:[%s1 + $0x1e0] sm:$0xff]
        %v459 = vld [vmem:[%s1 + $0x1e8] sm:$0xff]
        %v460 = vld [vmem:[%s1 + $0x1f0] sm:$0xff]
        %v461 = vld [vmem:[%s1 + $0x1f8] sm:$0xff]
        %v462 = vld [vmem:[%s1 + $0x200] sm:$0xff]
        %v463 = vld [vmem:[%s1 + $0x208] sm:$0xff]
        %v464 = vld [vmem:[%s1 + $0x210] sm:$0xff]
        %v465 = vld [vmem:[%s1 + $0x218] sm:$0xff]
        %v466 = vld [vmem:[%s1 + $0x220] sm:$0xff]
        %v467 = vld [vmem:[%s1 + $0x228] sm:$0xff]
        %v468 = vld [vmem:[%s1 + $0x230] sm:$0xff]
        %v469 = vld [vmem:[%s1 + $0x238] sm:$0xff]
        %v470 = vld [vmem:[%s1 + $0x240] sm:$0xff]
        %v471 = vld [vmem:[%s1 + $0x248] sm:$0xff]
        %v472 = vld [vmem:[%s1 + $0x250] sm:$0xff]
        %v473 = vld [vmem:[%s1 + $0x258] sm:$0xff]
        %v474 = vld [vmem:[%s1 + $0x260] sm:$0xff]
        %v475 = vld [vmem:[%s1 + $0x268] sm:$0xff]
        %v476 = vld [vmem:[%s1 + $0x270] sm:$0xff]
        %v477 = vld [vmem:[%s1 + $0x278] sm:$0xff]
        %v478 = vld [vmem:[%s1 + $0x280] sm:$0xff]
        %v479 = vld [vmem:[%s1 + $0x288] sm:$0xff]
        %v480 = vld [vmem:[%s1 + $0x290] sm:$0xff]
        %v481 = vld [vmem:[%s1 + $0x298] sm:$0xff]
        %v482 = vld [vmem:[%s1 + $0x2a0] sm:$0xff]
        %v483 = vld [vmem:[%s1 + $0x2a8] sm:$0xff]
        %v484 = vld [vmem:[%s1 + $0x2b0] sm:$0xff]
        %v485 = vld [vmem:[%s1 + $0x2b8] sm:$0xff]
        %v486 = vld [vmem:[%s1 + $0x2c0] sm:$0xff]
        %v487 = vld [vmem:[%s1 + $0x2c8] sm:$0xff]
        %v488 = vld [vmem:[%s1 + $0x2d0] sm:$0xff]
        %v489 = vld [vmem:[%s1 + $0x2d8] sm:$0xff]
        %v490 = vld [vmem:[%s1 + $0x2e0] sm:$0xff]
        %v491 = vld [vmem:[%s1 + $0x2e8] sm:$0xff]
        %v492 = vld [vmem:[%s1 + $0x2f0] sm:$0xff]
        %v493 = vld [vmem:[%s1 + $0x2f8] sm:$0xff]
        %v494 = vld [vmem:[%s1 + $0x300] sm:$0xff]
        %v495 = vld [vmem:[%s1 + $0x308] sm:$0xff]
        %v496 = vld [vmem:[%s1 + $0x310] sm:$0xff]
        %v497 = vld [vmem:[%s1 + $0x318] sm:$0xff]
        %v498 = vld [vmem:[%s1 + $0x320] sm:$0xff]
        %v499 = vld [vmem:[%s1 + $0x328] sm:$0xff]
        %v500 = vld [vmem:[%s1 + $0x330] sm:$0xff]
        %v501 = vld [vmem:[%s1 + $0x338] sm:$0xff]
        %v502 = vld [vmem:[%s1 + $0x340] sm:$0xff]
        %v503 = vld [vmem:[%s1 + $0x348] sm:$0xff]
        %v504 = vld [vmem:[%s1 + $0x350] sm:$0xff]
        %v505 = vld [vmem:[%s1 + $0x358] sm:$0xff]
        %v506 = vld [vmem:[%s1 + $0x360] sm:$0xff]
        %v507 = vld [vmem:[%s1 + $0x368] sm:$0xff]
        %v508 = vld [vmem:[%s1 + $0x370] sm:$0xff]
        %v509 = vld [vmem:[%s1 + $0x378] sm:$0xff]
        %v510 = vld [vmem:[%s1 + $0x380] sm:$0xff]
        %v511 = vld [vmem:[%s1 + $0x388] sm:$0xff]
        %v512 = vld [vmem:[%s1 + $0x390] sm:$0xff]
        %v513 = vld [vmem:[%s1 + $0x398] sm:$0xff]
        %v514 = vld [vmem:[%s1 + $0x3a0] sm:$0xff]
        %v515 = vld [vmem:[%s1 + $0x3a8] sm:$0xff]
        %v516 = vld [vmem:[%s1 + $0x3b0] sm:$0xff]
        %v517 = vld [vmem:[%s1 + $0x3b8] sm:$0xff]
        %v518 = vld [vmem:[%s1 + $0x3c0] sm:$0xff]
        %v519 = vld [vmem:[%s1 + $0x3c8] sm:$0xff]
        %v520 = vld [vmem:[%s1 + $0x3d0] sm:$0xff]
        %v521 = vld [vmem:[%s1 + $0x3d8] sm:$0xff]
        %v522 = vld [vmem:[%s1 + $0x3e0] sm:$0xff]
        %v523 = vld [vmem:[%s1 + $0x3e8] sm:$0xff]
        %v524 = vld [vmem:[%s1 + $0x3f0] sm:$0xff]
        %v525 = vld [vmem:[%s1 + $0x3f8] sm:$0xff]
        %v526 = vld [vmem:[%s1 + $0x400] sm:$0xff]
        %v527 = vld [vmem:[%s1 + $0x408] sm:$0xff]
        %v528 = vld [vmem:[%s1 + $0x410] sm:$0xff]
        %v529 = vld [vmem:[%s1 + $0x418] sm:$0xff]
        %v530 = vld [vmem:[%s1 + $0x420] sm:$0xff]
        %v531 = vld [vmem:[%s1 + $0x428] sm:$0xff]
        %v532 = vld [vmem:[%s1 + $0x430] sm:$0xff]
        %v533 = vld [vmem:[%s1 + $0x438] sm:$0xff]
        %v534 = vld [vmem:[%s1 + $0x440] sm:$0xff]
        %v535 = vld [vmem:[%s1 + $0x448] sm:$0xff]
        %v536 = vld [vmem:[%s1 + $0x450] sm:$0xff]
        %v537 = vld [vmem:[%s1 + $0x458] sm:$0xff]
        %v538 = vld [vmem:[%s1 + $0x460] sm:$0xff]
        %v539 = vld [vmem:[%s1 + $0x468] sm:$0xff]
        %v540 = vld [vmem:[%s1 + $0x470] sm:$0xff]
        %v541 = vld [vmem:[%s1 + $0x478] sm:$0xff]
        %v542 = vld [vmem:[%s1 + $0x480] sm:$0xff]
        %v543 = vld [vmem:[%s1 + $0x488] sm:$0xff]
        %v544 = vld [vmem:[%s1 + $0x490] sm:$0xff]
        %v545 = vld [vmem:[%s1 + $0x498] sm:$0xff]
        %v546 = vld [vmem:[%s1 + $0x4a0] sm:$0xff]
        %v547 = vld [vmem:[%s1 + $0x4a8] sm:$0xff]
        %v548 = vld [vmem:[%s1 + $0x4b0] sm:$0xff]
        %v549 = vld [vmem:[%s1 + $0x4b8] sm:$0xff]
        %v550 = vld [vmem:[%s1 + $0x4c0] sm:$0xff]
        %v551 = vld [vmem:[%s1 + $0x4c8] sm:$0xff]
        %v552 = vld [vmem:[%s1 + $0x4d0] sm:$0xff]
        %v553 = vld [vmem:[%s1 + $0x4d8] sm:$0xff]
        %v554 = vld [vmem:[%s1 + $0x4e0] sm:$0xff]
        %v555 = vld [vmem:[%s1 + $0x4e8] sm:$0xff]
        %v556 = vld [vmem:[%s1 + $0x4f0] sm:$0xff]
        %v557 = vld [vmem:[%s1 + $0x4f8] sm:$0xff]
        %v558 = vld [vmem:[%s1 + $0x500] sm:$0xff]
        %v559 = vld [vmem:[%s1 + $0x508] sm:$0xff]
        %v560 = vld [vmem:[%s1 + $0x510] sm:$0xff]
        %v561 = vld [vmem:[%s1 + $0x518] sm:$0xff]
        %v562 = vld [vmem:[%s1 + $0x520] sm:$0xff]
        %v563 = vld [vmem:[%s1 + $0x528] sm:$0xff]
        %v564 = vld [vmem:[%s1 + $0x530] sm:$0xff]
        %v565 = vld [vmem:[%s1 + $0x538] sm:$0xff]
        %v566 = vld [vmem:[%s1 + $0x540] sm:$0xff]
        %v567 = vld [vmem:[%s1 + $0x548] sm:$0xff]
        %v568 = vld [vmem:[%s1 + $0x550] sm:$0xff]
        %v569 = vld [vmem:[%s1 + $0x558] sm:$0xff]
        %v570 = vld [vmem:[%s1 + $0x560] sm:$0xff]
        %v571 = vld [vmem:[%s1 + $0x568] sm:$0xff]
        %v572 = vld [vmem:[%s1 + $0x570] sm:$0xff]
        %v573 = vld [vmem:[%s1 + $0x578] sm:$0xff]
        %v574 = vld [vmem:[%s1 + $0x580] sm:$0xff]
        %v575 = vld [vmem:[%s1 + $0x588] sm:$0xff]
        %v576 = vld [vmem:[%s1 + $0x590] sm:$0xff]
        %v577 = vld [vmem:[%s1 + $0x598] sm:$0xff]
        %v578 = vld [vmem:[%s1 + $0x5a0] sm:$0xff]
        %v579 = vld [vmem:[%s1 + $0x5a8] sm:$0xff]
        %v580 = vld [vmem:[%s1 + $0x5b0] sm:$0xff]
        %v581 = vld [vmem:[%s1 + $0x5b8] sm:$0xff]
        %v582 = vld [vmem:[%s1 + $0x5c0] sm:$0xff]
        %v583 = vld [vmem:[%s1 + $0x5c8] sm:$0xff]
        %v584 = vld [vmem:[%s1 + $0x5d0] sm:$0xff]
        %v585 = vld [vmem:[%s1 + $0x5d8] sm:$0xff]
        %v586 = vld [vmem:[%s1 + $0x5e0] sm:$0xff]
        %v587 = vld [vmem:[%s1 + $0x5e8] sm:$0xff]
        %v588 = vld [vmem:[%s1 + $0x5f0] sm:$0xff]
        %v589 = vld [vmem:[%s1 + $0x5f8] sm:$0xff]
        %v590 = vld [vmem:[%s1 + $0x600] sm:$0xff]
        %v591 = vld [vmem:[%s1 + $0x608] sm:$0xff]
        %v592 = vld [vmem:[%s1 + $0x610] sm:$0xff]
        %v593 = vld [vmem:[%s1 + $0x618] sm:$0xff]
        %v594 = vld [vmem:[%s2] sm:$0xf]
        %v596 = vlaneseq
        %v597 = vshrl.u32 %v596, 7
        %v598 = vsub.s32 0, %v597
        %v599 = vrot.slane %v594, %v598
        %v600 = vlaneseq
        %v601 = vshrl.u32 %v600, 7
        %v602 = vsub.s32 1, %v601
        %v603 = vrot.slane %v594, %v602
        %v604 = vlaneseq
        %v605 = vshrl.u32 %v604, 7
        %v606 = vsub.s32 2, %v605
        %v607 = vrot.slane %v594, %v606
        %v608 = vlaneseq
        %v609 = vshrl.u32 %v608, 7
        %v610 = vsub.s32 3, %v609
        %v611 = vrot.slane %v594, %v610
        %v812 = vunpack.c.l.b16 %v398
        %v813 = vunpack.c.h.b16 %v398
        %v814 = vunpack.c.l.b16 %v399
        %v815 = vunpack.c.h.b16 %v399
        %v816 = vunpack.c.l.b16 %v400
        %v817 = vunpack.c.h.b16 %v400
        %v818 = vunpack.c.l.b16 %v401
        %v819 = vunpack.c.h.b16 %v401
        %v820 = vunpack.c.l.b16 %v402
        %v821 = vunpack.c.h.b16 %v402
        %v822 = vunpack.c.l.b16 %v403
        %v823 = vunpack.c.h.b16 %v403
        %v824 = vunpack.c.l.b16 %v404
        %v825 = vunpack.c.h.b16 %v404
        %v826 = vunpack.c.l.b16 %v405
        %v827 = vunpack.c.h.b16 %v405
        %v828 = vunpack.c.l.b16 %v406
        %v829 = vunpack.c.h.b16 %v406
        %v830 = vunpack.c.l.b16 %v407
        %v831 = vunpack.c.h.b16 %v407
        %v832 = vunpack.c.l.b16 %v408
        %v833 = vunpack.c.h.b16 %v408
        %v834 = vunpack.c.l.b16 %v409
        %v835 = vunpack.c.h.b16 %v409
        %v836 = vunpack.c.l.b16 %v410
        %v837 = vunpack.c.h.b16 %v410
        %v838 = vunpack.c.l.b16 %v411
        %v839 = vunpack.c.h.b16 %v411
        %v840 = vunpack.c.l.b16 %v412
        %v841 = vunpack.c.h.b16 %v412
        %v842 = vunpack.c.l.b16 %v413
        %v843 = vunpack.c.h.b16 %v413
        %v844 = vunpack.c.l.b16 %v414
        %v845 = vunpack.c.h.b16 %v414
        %v846 = vunpack.c.l.b16 %v415
        %v847 = vunpack.c.h.b16 %v415
        %v848 = vunpack.c.l.b16 %v416
        %v849 = vunpack.c.h.b16 %v416
        %v850 = vunpack.c.l.b16 %v417
        %v851 = vunpack.c.h.b16 %v417
        %v852 = vunpack.c.l.b16 %v418
        %v853 = vunpack.c.h.b16 %v418
        %v854 = vunpack.c.l.b16 %v419
        %v855 = vunpack.c.h.b16 %v419
        %v856 = vunpack.c.l.b16 %v420
        %v857 = vunpack.c.h.b16 %v420
        %v858 = vunpack.c.l.b16 %v421
        %v859 = vunpack.c.h.b16 %v421
        %v860 = vunpack.c.l.b16 %v422
        %v861 = vunpack.c.h.b16 %v422
        %v862 = vunpack.c.l.b16 %v423
        %v863 = vunpack.c.h.b16 %v423
        %v864 = vunpack.c.l.b16 %v424
        %v865 = vunpack.c.h.b16 %v424
        %v866 = vunpack.c.l.b16 %v425
        %v867 = vunpack.c.h.b16 %v425
        %v868 = vunpack.c.l.b16 %v426
        %v869 = vunpack.c.h.b16 %v426
        %v870 = vunpack.c.l.b16 %v427
        %v871 = vunpack.c.h.b16 %v427
        %v872 = vunpack.c.l.b16 %v428
        %v873 = vunpack.c.h.b16 %v428
        %v874 = vunpack.c.l.b16 %v429
        %v875 = vunpack.c.h.b16 %v429
        %v876 = vunpack.c.l.b16 %v430
        %v877 = vunpack.c.h.b16 %v430
        %v878 = vunpack.c.l.b16 %v431
        %v879 = vunpack.c.h.b16 %v431
        %v880 = vunpack.c.l.b16 %v432
        %v881 = vunpack.c.h.b16 %v432
        %v882 = vunpack.c.l.b16 %v433
        %v883 = vunpack.c.h.b16 %v433
        %v884 = vunpack.c.l.b16 %v434
        %v885 = vunpack.c.h.b16 %v434
        %v886 = vunpack.c.l.b16 %v435
        %v887 = vunpack.c.h.b16 %v435
        %v888 = vunpack.c.l.b16 %v436
        %v889 = vunpack.c.h.b16 %v436
        %v890 = vunpack.c.l.b16 %v437
        %v891 = vunpack.c.h.b16 %v437
        %v892 = vunpack.c.l.b16 %v438
        %v893 = vunpack.c.h.b16 %v438
        %v894 = vunpack.c.l.b16 %v439
        %v895 = vunpack.c.h.b16 %v439
        %v896 = vunpack.c.l.b16 %v440
        %v897 = vunpack.c.h.b16 %v440
        %v898 = vunpack.c.l.b16 %v441
        %v899 = vunpack.c.h.b16 %v441
        %v900 = vunpack.c.l.b16 %v442
        %v901 = vunpack.c.h.b16 %v442
        %v902 = vunpack.c.l.b16 %v443
        %v903 = vunpack.c.h.b16 %v443
        %v904 = vunpack.c.l.b16 %v444
        %v905 = vunpack.c.h.b16 %v444
        %v906 = vunpack.c.l.b16 %v445
        %v907 = vunpack.c.h.b16 %v445
        %v908 = vunpack.c.l.b16 %v446
        %v909 = vunpack.c.h.b16 %v446
        %v910 = vunpack.c.l.b16 %v447
        %v911 = vunpack.c.h.b16 %v447
        %v912 = vunpack.c.l.b16 %v448
        %v913 = vunpack.c.h.b16 %v448
        %v914 = vunpack.c.l.b16 %v449
        %v915 = vunpack.c.h.b16 %v449
        %v916 = vunpack.c.l.b16 %v450
        %v917 = vunpack.c.h.b16 %v450
        %v918 = vunpack.c.l.b16 %v451
        %v919 = vunpack.c.h.b16 %v451
        %v920 = vunpack.c.l.b16 %v452
        %v921 = vunpack.c.h.b16 %v452
        %v922 = vunpack.c.l.b16 %v453
        %v923 = vunpack.c.h.b16 %v453
        %v924 = vunpack.c.l.b16 %v454
        %v925 = vunpack.c.h.b16 %v454
        %v926 = vunpack.c.l.b16 %v455
        %v927 = vunpack.c.h.b16 %v455
        %v928 = vunpack.c.l.b16 %v456
        %v929 = vunpack.c.h.b16 %v456
        %v930 = vunpack.c.l.b16 %v457
        %v931 = vunpack.c.h.b16 %v457
        %v932 = vunpack.c.l.b16 %v458
        %v933 = vunpack.c.h.b16 %v458
        %v934 = vunpack.c.l.b16 %v459
        %v935 = vunpack.c.h.b16 %v459
        %v936 = vunpack.c.l.b16 %v460
        %v937 = vunpack.c.h.b16 %v460
        %v938 = vunpack.c.l.b16 %v461
        %v939 = vunpack.c.h.b16 %v461
        %v940 = vunpack.c.l.b16 %v462
        %v941 = vunpack.c.h.b16 %v462
        %v942 = vunpack.c.l.b16 %v463
        %v943 = vunpack.c.h.b16 %v463
        %v944 = vunpack.c.l.b16 %v464
        %v945 = vunpack.c.h.b16 %v464
        %v946 = vunpack.c.l.b16 %v465
        %v947 = vunpack.c.h.b16 %v465
        %v948 = vunpack.c.l.b16 %v466
        %v949 = vunpack.c.h.b16 %v466
        %v950 = vunpack.c.l.b16 %v467
        %v951 = vunpack.c.h.b16 %v467
        %v952 = vunpack.c.l.b16 %v468
        %v953 = vunpack.c.h.b16 %v468
        %v954 = vunpack.c.l.b16 %v469
        %v955 = vunpack.c.h.b16 %v469
        %v956 = vunpack.c.l.b16 %v470
        %v957 = vunpack.c.h.b16 %v470
        %v958 = vunpack.c.l.b16 %v471
        %v959 = vunpack.c.h.b16 %v471
        %v960 = vunpack.c.l.b16 %v472
        %v961 = vunpack.c.h.b16 %v472
        %v962 = vunpack.c.l.b16 %v473
        %v963 = vunpack.c.h.b16 %v473
        %v964 = vunpack.c.l.b16 %v474
        %v965 = vunpack.c.h.b16 %v474
        %v966 = vunpack.c.l.b16 %v475
        %v967 = vunpack.c.h.b16 %v475
        %v968 = vunpack.c.l.b16 %v476
        %v969 = vunpack.c.h.b16 %v476
        %v970 = vunpack.c.l.b16 %v477
        %v971 = vunpack.c.h.b16 %v477
        %v972 = vunpack.c.l.b16 %v478
        %v973 = vunpack.c.h.b16 %v478
        %v974 = vunpack.c.l.b16 %v479
        %v975 = vunpack.c.h.b16 %v479
        %v976 = vunpack.c.l.b16 %v480
        %v977 = vunpack.c.h.b16 %v480
        %v978 = vunpack.c.l.b16 %v481
        %v979 = vunpack.c.h.b16 %v481
        %v980 = vunpack.c.l.b16 %v482
        %v981 = vunpack.c.h.b16 %v482
        %v982 = vunpack.c.l.b16 %v483
        %v983 = vunpack.c.h.b16 %v483
        %v984 = vunpack.c.l.b16 %v484
        %v985 = vunpack.c.h.b16 %v484
        %v986 = vunpack.c.l.b16 %v485
        %v987 = vunpack.c.h.b16 %v485
        %v988 = vunpack.c.l.b16 %v486
        %v989 = vunpack.c.h.b16 %v486
        %v990 = vunpack.c.l.b16 %v487
        %v991 = vunpack.c.h.b16 %v487
        %v992 = vunpack.c.l.b16 %v488
        %v993 = vunpack.c.h.b16 %v488
        %v994 = vunpack.c.l.b16 %v489
        %v995 = vunpack.c.h.b16 %v489
        %v996 = vunpack.c.l.b16 %v490
        %v997 = vunpack.c.h.b16 %v490
        %v998 = vunpack.c.l.b16 %v491
        %v999 = vunpack.c.h.b16 %v491
        %v1000 = vunpack.c.l.b16 %v492
        %v1001 = vunpack.c.h.b16 %v492
        %v1002 = vunpack.c.l.b16 %v493
        %v1003 = vunpack.c.h.b16 %v493
        %v1004 = vunpack.c.l.b16 %v494
        %v1005 = vunpack.c.h.b16 %v494
        %v1006 = vunpack.c.l.b16 %v495
        %v1007 = vunpack.c.h.b16 %v495
        %v1008 = vunpack.c.l.b16 %v496
        %v1009 = vunpack.c.h.b16 %v496
        %v1010 = vunpack.c.l.b16 %v497
        %v1011 = vunpack.c.h.b16 %v497
        %v1012 = vunpack.c.l.b16 %v498
        %v1013 = vunpack.c.h.b16 %v498
        %v1014 = vunpack.c.l.b16 %v499
        %v1015 = vunpack.c.h.b16 %v499
        %v1016 = vunpack.c.l.b16 %v500
        %v1017 = vunpack.c.h.b16 %v500
        %v1018 = vunpack.c.l.b16 %v501
        %v1019 = vunpack.c.h.b16 %v501
        %v1020 = vunpack.c.l.b16 %v502
        %v1021 = vunpack.c.h.b16 %v502
        %v1022 = vunpack.c.l.b16 %v503
        %v1023 = vunpack.c.h.b16 %v503
        %v1024 = vunpack.c.l.b16 %v504
        %v1025 = vunpack.c.h.b16 %v504
        %v1026 = vunpack.c.l.b16 %v505
        %v1027 = vunpack.c.h.b16 %v505
        %v1028 = vunpack.c.l.b16 %v506
        %v1029 = vunpack.c.h.b16 %v506
        %v1030 = vunpack.c.l.b16 %v507
        %v1031 = vunpack.c.h.b16 %v507
        %v1032 = vunpack.c.l.b16 %v508
        %v1033 = vunpack.c.h.b16 %v508
        %v1034 = vunpack.c.l.b16 %v509
        %v1035 = vunpack.c.h.b16 %v509
        %v1036 = vunpack.c.l.b16 %v510
        %v1037 = vunpack.c.h.b16 %v510
        %v1038 = vunpack.c.l.b16 %v511
        %v1039 = vunpack.c.h.b16 %v511
        %v1040 = vunpack.c.l.b16 %v512
        %v1041 = vunpack.c.h.b16 %v512
        %v1042 = vunpack.c.l.b16 %v513
        %v1043 = vunpack.c.h.b16 %v513
        %v1044 = vunpack.c.l.b16 %v514
        %v1045 = vunpack.c.h.b16 %v514
        %v1046 = vunpack.c.l.b16 %v515
        %v1047 = vunpack.c.h.b16 %v515
        %v1048 = vunpack.c.l.b16 %v516
        %v1049 = vunpack.c.h.b16 %v516
        %v1050 = vunpack.c.l.b16 %v517
        %v1051 = vunpack.c.h.b16 %v517
        %v1052 = vunpack.c.l.b16 %v518
        %v1053 = vunpack.c.h.b16 %v518
        %v1054 = vunpack.c.l.b16 %v519
        %v1055 = vunpack.c.h.b16 %v519
        %v1056 = vunpack.c.l.b16 %v520
        %v1057 = vunpack.c.h.b16 %v520
        %v1058 = vunpack.c.l.b16 %v521
        %v1059 = vunpack.c.h.b16 %v521
        %v1060 = vunpack.c.l.b16 %v522
        %v1061 = vunpack.c.h.b16 %v522
        %v1062 = vunpack.c.l.b16 %v523
        %v1063 = vunpack.c.h.b16 %v523
        %v1064 = vunpack.c.l.b16 %v524
        %v1065 = vunpack.c.h.b16 %v524
        %v1066 = vunpack.c.l.b16 %v525
        %v1067 = vunpack.c.h.b16 %v525
        %v1068 = vunpack.c.l.b16 %v526
        %v1069 = vunpack.c.h.b16 %v526
        %v1070 = vunpack.c.l.b16 %v527
        %v1071 = vunpack.c.h.b16 %v527
        %v1072 = vunpack.c.l.b16 %v528
        %v1073 = vunpack.c.h.b16 %v528
        %v1074 = vunpack.c.l.b16 %v529
        %v1075 = vunpack.c.h.b16 %v529
        %v1076 = vunpack.c.l.b16 %v530
        %v1077 = vunpack.c.h.b16 %v530
        %v1078 = vunpack.c.l.b16 %v531
        %v1079 = vunpack.c.h.b16 %v531
        %v1080 = vunpack.c.l.b16 %v532
        %v1081 = vunpack.c.h.b16 %v532
        %v1082 = vunpack.c.l.b16 %v533
        %v1083 = vunpack.c.h.b16 %v533
        %v1084 = vunpack.c.l.b16 %v534
        %v1085 = vunpack.c.h.b16 %v534
        %v1086 = vunpack.c.l.b16 %v535
        %v1087 = vunpack.c.h.b16 %v535
        %v1088 = vunpack.c.l.b16 %v536
        %v1089 = vunpack.c.h.b16 %v536
        %v1090 = vunpack.c.l.b16 %v537
        %v1091 = vunpack.c.h.b16 %v537
        %v1092 = vunpack.c.l.b16 %v538
        %v1093 = vunpack.c.h.b16 %v538
        %v1094 = vunpack.c.l.b16 %v539
        %v1095 = vunpack.c.h.b16 %v539
        %v1096 = vunpack.c.l.b16 %v540
        %v1097 = vunpack.c.h.b16 %v540
        %v1098 = vunpack.c.l.b16 %v541
        %v1099 = vunpack.c.h.b16 %v541
        %v1100 = vunpack.c.l.b16 %v542
        %v1101 = vunpack.c.h.b16 %v542
        %v1102 = vunpack.c.l.b16 %v543
        %v1103 = vunpack.c.h.b16 %v543
        %v1104 = vunpack.c.l.b16 %v544
        %v1105 = vunpack.c.h.b16 %v544
        %v1106 = vunpack.c.l.b16 %v545
        %v1107 = vunpack.c.h.b16 %v545
        %v1108 = vunpack.c.l.b16 %v546
        %v1109 = vunpack.c.h.b16 %v546
        %v1110 = vunpack.c.l.b16 %v547
        %v1111 = vunpack.c.h.b16 %v547
        %v1112 = vunpack.c.l.b16 %v548
        %v1113 = vunpack.c.h.b16 %v548
        %v1114 = vunpack.c.l.b16 %v549
        %v1115 = vunpack.c.h.b16 %v549
        %v1116 = vunpack.c.l.b16 %v550
        %v1117 = vunpack.c.h.b16 %v550
        %v1118 = vunpack.c.l.b16 %v551
        %v1119 = vunpack.c.h.b16 %v551
        %v1120 = vunpack.c.l.b16 %v552
        %v1121 = vunpack.c.h.b16 %v552
        %v1122 = vunpack.c.l.b16 %v553
        %v1123 = vunpack.c.h.b16 %v553
        %v1124 = vunpack.c.l.b16 %v554
        %v1125 = vunpack.c.h.b16 %v554
        %v1126 = vunpack.c.l.b16 %v555
        %v1127 = vunpack.c.h.b16 %v555
        %v1128 = vunpack.c.l.b16 %v556
        %v1129 = vunpack.c.h.b16 %v556
        %v1130 = vunpack.c.l.b16 %v557
        %v1131 = vunpack.c.h.b16 %v557
        %v1132 = vunpack.c.l.b16 %v558
        %v1133 = vunpack.c.h.b16 %v558
        %v1134 = vunpack.c.l.b16 %v559
        %v1135 = vunpack.c.h.b16 %v559
        %v1136 = vunpack.c.l.b16 %v560
        %v1137 = vunpack.c.h.b16 %v560
        %v1138 = vunpack.c.l.b16 %v561
        %v1139 = vunpack.c.h.b16 %v561
        %v1140 = vunpack.c.l.b16 %v562
        %v1141 = vunpack.c.h.b16 %v562
        %v1142 = vunpack.c.l.b16 %v563
        %v1143 = vunpack.c.h.b16 %v563
        %v1144 = vunpack.c.l.b16 %v564
        %v1145 = vunpack.c.h.b16 %v564
        %v1146 = vunpack.c.l.b16 %v565
        %v1147 = vunpack.c.h.b16 %v565
        %v1148 = vunpack.c.l.b16 %v566
        %v1149 = vunpack.c.h.b16 %v566
        %v1150 = vunpack.c.l.b16 %v567
        %v1151 = vunpack.c.h.b16 %v567
        %v1152 = vunpack.c.l.b16 %v568
        %v1153 = vunpack.c.h.b16 %v568
        %v1154 = vunpack.c.l.b16 %v569
        %v1155 = vunpack.c.h.b16 %v569
        %v1156 = vunpack.c.l.b16 %v570
        %v1157 = vunpack.c.h.b16 %v570
        %v1158 = vunpack.c.l.b16 %v571
        %v1159 = vunpack.c.h.b16 %v571
        %v1160 = vunpack.c.l.b16 %v572
        %v1161 = vunpack.c.h.b16 %v572
        %v1162 = vunpack.c.l.b16 %v573
        %v1163 = vunpack.c.h.b16 %v573
        %v1164 = vunpack.c.l.b16 %v574
        %v1165 = vunpack.c.h.b16 %v574
        %v1166 = vunpack.c.l.b16 %v575
        %v1167 = vunpack.c.h.b16 %v575
        %v1168 = vunpack.c.l.b16 %v576
        %v1169 = vunpack.c.h.b16 %v576
        %v1170 = vunpack.c.l.b16 %v577
        %v1171 = vunpack.c.h.b16 %v577
        %v1172 = vunpack.c.l.b16 %v578
        %v1173 = vunpack.c.h.b16 %v578
        %v1174 = vunpack.c.l.b16 %v579
        %v1175 = vunpack.c.h.b16 %v579
        %v1176 = vunpack.c.l.b16 %v580
        %v1177 = vunpack.c.h.b16 %v580
        %v1178 = vunpack.c.l.b16 %v581
        %v1179 = vunpack.c.h.b16 %v581
        %v1180 = vunpack.c.l.b16 %v582
        %v1181 = vunpack.c.h.b16 %v582
        %v1182 = vunpack.c.l.b16 %v583
        %v1183 = vunpack.c.h.b16 %v583
        %v1184 = vunpack.c.l.b16 %v584
        %v1185 = vunpack.c.h.b16 %v584
        %v1186 = vunpack.c.l.b16 %v585
        %v1187 = vunpack.c.h.b16 %v585
        %v1188 = vunpack.c.l.b16 %v586
        %v1189 = vunpack.c.h.b16 %v586
        %v1190 = vunpack.c.l.b16 %v587
        %v1191 = vunpack.c.h.b16 %v587
        %v1192 = vunpack.c.l.b16 %v588
        %v1193 = vunpack.c.h.b16 %v588
        %v1194 = vunpack.c.l.b16 %v589
        %v1195 = vunpack.c.h.b16 %v589
        %v1196 = vunpack.c.l.b16 %v590
        %v1197 = vunpack.c.h.b16 %v590
        %v1198 = vunpack.c.l.b16 %v591
        %v1199 = vunpack.c.h.b16 %v591
        %v1200 = vunpack.c.l.b16 %v592
        %v1201 = vunpack.c.h.b16 %v592
        %v1202 = vunpack.c.l.b16 %v593
        %v1203 = vunpack.c.h.b16 %v593
        %v1204 = vpack.c.b16 %v816, %v812
        %v1205 = vpack.c.b16 %v817, %v813
        %v1206 = vpack.c.b16 %v818, %v814
        %v1207 = vpack.c.b16 %v819, %v815
        %v1208 = vpack.c.b16 %v824, %v820
        %v1209 = vpack.c.b16 %v825, %v821
        %v1210 = vpack.c.b16 %v826, %v822
        %v1211 = vpack.c.b16 %v827, %v823
        %v1212 = vpack.c.b16 %v832, %v828
        %v1213 = vpack.c.b16 %v833, %v829
        %v1214 = vpack.c.b16 %v834, %v830
        %v1215 = vpack.c.b16 %v835, %v831
        %v1216 = vpack.c.b16 %v840, %v836
        %v1217 = vpack.c.b16 %v841, %v837
        %v1218 = vpack.c.b16 %v842, %v838
        %v1219 = vpack.c.b16 %v843, %v839
        %v1220 = vpack.c.b16 %v848, %v844
        %v1221 = vpack.c.b16 %v849, %v845
        %v1222 = vpack.c.b16 %v850, %v846
        %v1223 = vpack.c.b16 %v851, %v847
        %v1224 = vpack.c.b16 %v856, %v852
        %v1225 = vpack.c.b16 %v857, %v853
        %v1226 = vpack.c.b16 %v858, %v854
        %v1227 = vpack.c.b16 %v859, %v855
        %v1228 = vpack.c.b16 %v864, %v860
        %v1229 = vpack.c.b16 %v865, %v861
        %v1230 = vpack.c.b16 %v866, %v862
        %v1231 = vpack.c.b16 %v867, %v863
        %v1232 = vpack.c.b16 %v872, %v868
        %v1233 = vpack.c.b16 %v873, %v869
        %v1234 = vpack.c.b16 %v874, %v870
        %v1235 = vpack.c.b16 %v875, %v871
        %v1236 = vpack.c.b16 %v880, %v876
        %v1237 = vpack.c.b16 %v881, %v877
        %v1238 = vpack.c.b16 %v882, %v878
        %v1239 = vpack.c.b16 %v883, %v879
        %v1240 = vpack.c.b16 %v888, %v884
        %v1241 = vpack.c.b16 %v889, %v885
        %v1242 = vpack.c.b16 %v890, %v886
        %v1243 = vpack.c.b16 %v891, %v887
        %v1244 = vpack.c.b16 %v896, %v892
        %v1245 = vpack.c.b16 %v897, %v893
        %v1246 = vpack.c.b16 %v898, %v894
        %v1247 = vpack.c.b16 %v899, %v895
        %v1248 = vpack.c.b16 %v904, %v900
        %v1249 = vpack.c.b16 %v905, %v901
        %v1250 = vpack.c.b16 %v906, %v902
        %v1251 = vpack.c.b16 %v907, %v903
        %v1252 = vpack.c.b16 %v912, %v908
        %v1253 = vpack.c.b16 %v913, %v909
        %v1254 = vpack.c.b16 %v914, %v910
        %v1255 = vpack.c.b16 %v915, %v911
        %v1256 = vpack.c.b16 %v920, %v916
        %v1257 = vpack.c.b16 %v921, %v917
        %v1258 = vpack.c.b16 %v922, %v918
        %v1259 = vpack.c.b16 %v923, %v919
        %v1260 = vpack.c.b16 %v928, %v924
        %v1261 = vpack.c.b16 %v929, %v925
        %v1262 = vpack.c.b16 %v930, %v926
        %v1263 = vpack.c.b16 %v931, %v927
        %v1264 = vpack.c.b16 %v936, %v932
        %v1265 = vpack.c.b16 %v937, %v933
        %v1266 = vpack.c.b16 %v938, %v934
        %v1267 = vpack.c.b16 %v939, %v935
        %v1268 = vpack.c.b16 %v944, %v940
        %v1269 = vpack.c.b16 %v945, %v941
        %v1270 = vpack.c.b16 %v946, %v942
        %v1271 = vpack.c.b16 %v947, %v943
        %v1272 = vpack.c.b16 %v952, %v948
        %v1273 = vpack.c.b16 %v953, %v949
        %v1274 = vpack.c.b16 %v954, %v950
        %v1275 = vpack.c.b16 %v955, %v951
        %v1276 = vpack.c.b16 %v960, %v956
        %v1277 = vpack.c.b16 %v961, %v957
        %v1278 = vpack.c.b16 %v962, %v958
        %v1279 = vpack.c.b16 %v963, %v959
        %v1280 = vpack.c.b16 %v968, %v964
        %v1281 = vpack.c.b16 %v969, %v965
        %v1282 = vpack.c.b16 %v970, %v966
        %v1283 = vpack.c.b16 %v971, %v967
        %v1284 = vpack.c.b16 %v976, %v972
        %v1285 = vpack.c.b16 %v977, %v973
        %v1286 = vpack.c.b16 %v978, %v974
        %v1287 = vpack.c.b16 %v979, %v975
        %v1288 = vpack.c.b16 %v984, %v980
        %v1289 = vpack.c.b16 %v985, %v981
        %v1290 = vpack.c.b16 %v986, %v982
        %v1291 = vpack.c.b16 %v987, %v983
        %v1292 = vpack.c.b16 %v992, %v988
        %v1293 = vpack.c.b16 %v993, %v989
        %v1294 = vpack.c.b16 %v994, %v990
        %v1295 = vpack.c.b16 %v995, %v991
        %v1296 = vpack.c.b16 %v1000, %v996
        %v1297 = vpack.c.b16 %v1001, %v997
        %v1298 = vpack.c.b16 %v1002, %v998
        %v1299 = vpack.c.b16 %v1003, %v999
        %v1300 = vpack.c.b16 %v1008, %v1004
        %v1301 = vpack.c.b16 %v1009, %v1005
        %v1302 = vpack.c.b16 %v1010, %v1006
        %v1303 = vpack.c.b16 %v1011, %v1007
        %v1304 = vpack.c.b16 %v1016, %v1012
        %v1305 = vpack.c.b16 %v1017, %v1013
        %v1306 = vpack.c.b16 %v1018, %v1014
        %v1307 = vpack.c.b16 %v1019, %v1015
        %v1308 = vpack.c.b16 %v1024, %v1020
        %v1309 = vpack.c.b16 %v1025, %v1021
        %v1310 = vpack.c.b16 %v1026, %v1022
        %v1311 = vpack.c.b16 %v1027, %v1023
        %v1312 = vpack.c.b16 %v1032, %v1028
        %v1313 = vpack.c.b16 %v1033, %v1029
        %v1314 = vpack.c.b16 %v1034, %v1030
        %v1315 = vpack.c.b16 %v1035, %v1031
        %v1316 = vpack.c.b16 %v1040, %v1036
        %v1317 = vpack.c.b16 %v1041, %v1037
        %v1318 = vpack.c.b16 %v1042, %v1038
        %v1319 = vpack.c.b16 %v1043, %v1039
        %v1320 = vpack.c.b16 %v1048, %v1044
        %v1321 = vpack.c.b16 %v1049, %v1045
        %v1322 = vpack.c.b16 %v1050, %v1046
        %v1323 = vpack.c.b16 %v1051, %v1047
        %v1324 = vpack.c.b16 %v1056, %v1052
        %v1325 = vpack.c.b16 %v1057, %v1053
        %v1326 = vpack.c.b16 %v1058, %v1054
        %v1327 = vpack.c.b16 %v1059, %v1055
        %v1328 = vpack.c.b16 %v1064, %v1060
        %v1329 = vpack.c.b16 %v1065, %v1061
        %v1330 = vpack.c.b16 %v1066, %v1062
        %v1331 = vpack.c.b16 %v1067, %v1063
        %v1332 = vpack.c.b16 %v1072, %v1068
        %v1333 = vpack.c.b16 %v1073, %v1069
        %v1334 = vpack.c.b16 %v1074, %v1070
        %v1335 = vpack.c.b16 %v1075, %v1071
        %v1336 = vpack.c.b16 %v1080, %v1076
        %v1337 = vpack.c.b16 %v1081, %v1077
        %v1338 = vpack.c.b16 %v1082, %v1078
        %v1339 = vpack.c.b16 %v1083, %v1079
        %v1340 = vpack.c.b16 %v1088, %v1084
        %v1341 = vpack.c.b16 %v1089, %v1085
        %v1342 = vpack.c.b16 %v1090, %v1086
        %v1343 = vpack.c.b16 %v1091, %v1087
        %v1344 = vpack.c.b16 %v1096, %v1092
        %v1345 = vpack.c.b16 %v1097, %v1093
        %v1346 = vpack.c.b16 %v1098, %v1094
        %v1347 = vpack.c.b16 %v1099, %v1095
        %v1348 = vpack.c.b16 %v1104, %v1100
        %v1349 = vpack.c.b16 %v1105, %v1101
        %v1350 = vpack.c.b16 %v1106, %v1102
        %v1351 = vpack.c.b16 %v1107, %v1103
        %v1352 = vpack.c.b16 %v1112, %v1108
        %v1353 = vpack.c.b16 %v1113, %v1109
        %v1354 = vpack.c.b16 %v1114, %v1110
        %v1355 = vpack.c.b16 %v1115, %v1111
        %v1356 = vpack.c.b16 %v1120, %v1116
        %v1357 = vpack.c.b16 %v1121, %v1117
        %v1358 = vpack.c.b16 %v1122, %v1118
        %v1359 = vpack.c.b16 %v1123, %v1119
        %v1360 = vpack.c.b16 %v1128, %v1124
        %v1361 = vpack.c.b16 %v1129, %v1125
        %v1362 = vpack.c.b16 %v1130, %v1126
        %v1363 = vpack.c.b16 %v1131, %v1127
        %v1364 = vpack.c.b16 %v1136, %v1132
        %v1365 = vpack.c.b16 %v1137, %v1133
        %v1366 = vpack.c.b16 %v1138, %v1134
        %v1367 = vpack.c.b16 %v1139, %v1135
        %v1368 = vpack.c.b16 %v1144, %v1140
        %v1369 = vpack.c.b16 %v1145, %v1141
        %v1370 = vpack.c.b16 %v1146, %v1142
        %v1371 = vpack.c.b16 %v1147, %v1143
        %v1372 = vpack.c.b16 %v1152, %v1148
        %v1373 = vpack.c.b16 %v1153, %v1149
        %v1374 = vpack.c.b16 %v1154, %v1150
        %v1375 = vpack.c.b16 %v1155, %v1151
        %v1376 = vpack.c.b16 %v1160, %v1156
        %v1377 = vpack.c.b16 %v1161, %v1157
        %v1378 = vpack.c.b16 %v1162, %v1158
        %v1379 = vpack.c.b16 %v1163, %v1159
        %v1380 = vpack.c.b16 %v1168, %v1164
        %v1381 = vpack.c.b16 %v1169, %v1165
        %v1382 = vpack.c.b16 %v1170, %v1166
        %v1383 = vpack.c.b16 %v1171, %v1167
        %v1384 = vpack.c.b16 %v1176, %v1172
        %v1385 = vpack.c.b16 %v1177, %v1173
        %v1386 = vpack.c.b16 %v1178, %v1174
        %v1387 = vpack.c.b16 %v1179, %v1175
        %v1388 = vpack.c.b16 %v1184, %v1180
        %v1389 = vpack.c.b16 %v1185, %v1181
        %v1390 = vpack.c.b16 %v1186, %v1182
        %v1391 = vpack.c.b16 %v1187, %v1183
        %v1392 = vpack.c.b16 %v1192, %v1188
        %v1393 = vpack.c.b16 %v1193, %v1189
        %v1394 = vpack.c.b16 %v1194, %v1190
        %v1395 = vpack.c.b16 %v1195, %v1191
        %v1396 = vpack.c.b16 %v1200, %v1196
        %v1397 = vpack.c.b16 %v1201, %v1197
        %v1398 = vpack.c.b16 %v1202, %v1198
        %v1399 = vpack.c.b16 %v1203, %v1199
        %vm1596 = vcmask 130048
        %v1598 = vsel %vm1596, %v348, 0
        %v1601 = vsel %vm1596, %v355, 0
        %v1604 = vsel %vm1596, %v362, 0
        %v1607 = vsel %vm1596, %v369, 0
        %v1610 = vsel %vm1596, %v376, 0
        %v1613 = vsel %vm1596, %v383, 0
        %v1616 = vsel %vm1596, %v390, 0
        %v1619 = vsel %vm1596, %v397, 0
        %1621 = vmatprep.subr.bf16.mxu0 %v1205
        %1622 = vmatpush1.bf16.msra.mxu0 %v1204
        %1623 = vmatprep.subr.bf16.mxu0 %v1209
        %1624 = vmatpush1.bf16.msra.mxu0 %v1208
        %1625 = vmatprep.subr.bf16.mxu0 %v1213
        %1626 = vmatpush1.bf16.msra.mxu0 %v1212
        %1627 = vmatprep.subr.bf16.mxu0 %v1217
        %1628 = vmatpush1.bf16.msra.mxu0 %v1216
        %1629 = vmatprep.subr.bf16.mxu0 %v1221
        %1630 = vmatpush1.bf16.msra.mxu0 %v1220
        %1631 = vmatprep.subr.bf16.mxu0 %v1225
        %1632 = vmatpush1.bf16.msra.mxu0 %v1224
        %1633 = vmatprep.subr.bf16.mxu0 %v1229
        %1634 = vmatpush1.bf16.msra.mxu0 %v1228
        %1635 = vmatprep.subr.bf16.mxu0 %v1233
        %1636 = vmatpush1.bf16.msra.mxu0 %v1232
        %1637 = vmatprep.subr.bf16.mxu0 %v1237
        %1638 = vmatpush1.bf16.msra.mxu0 %v1236
        %1639 = vmatprep.subr.bf16.mxu0 %v1241
        %1640 = vmatpush1.bf16.msra.mxu0 %v1240
        %1641 = vmatprep.subr.bf16.mxu0 %v1245
        %1642 = vmatpush1.bf16.msra.mxu0 %v1244
        %1643 = vmatprep.subr.bf16.mxu0 %v1249
        %1644 = vmatpush1.bf16.msra.mxu0 %v1248
        %1645 = vmatprep.subr.bf16.mxu0 %v1253
        %1646 = vmatpush1.bf16.msra.mxu0 %v1252
        %1647 = vmatprep.subr.bf16.mxu0 %v1257
        %1648 = vmatpush1.bf16.msra.mxu0 %v1256
        %1649 = vmatprep.subr.bf16.mxu0 %v1261
        %1650 = vmatpush1.bf16.msra.mxu0 %v1260
        %1651 = vmatprep.subr.bf16.mxu0 %v1265
        %1652 = vmatpush1.bf16.msra.mxu0 %v1264
        %1653 = vmatprep.mubr.bf16.mxu0 %v343
        %1654 = vmatmul.mubr.bf16.gmra.mrb[0].mxu0 %v342
        %v1655 = vpop.f32.mrb[0].mxu0
        %v1656 = vadd.f32 %v599, %v1655
        %v1657 = vpop.f32.mrb[0].mxu0
        %v1658 = vadd.f32 %v603, %v1657
        %v1659 = vpop.f32.mrb[0].mxu0
        %v1660 = vadd.f32 %v599, %v1659
        %v1661 = vpop.f32.mrb[0].mxu0
        %v1662 = vadd.f32 %v603, %v1661
        %1663 = vmatprep.mubr.bf16.mxu0 %v350
        %1664 = vmatmul.mubr.bf16.gmra.mrb[0].mxu0 %v349
        %v1665 = vpop.f32.mrb[0].mxu0
        %v1666 = vadd.f32 %v599, %v1665
        %v1667 = vpop.f32.mrb[0].mxu0
        %v1668 = vadd.f32 %v603, %v1667
        %v1669 = vpop.f32.mrb[0].mxu0
        %v1670 = vadd.f32 %v599, %v1669
        %v1671 = vpop.f32.mrb[0].mxu0
        %v1672 = vadd.f32 %v603, %v1671
        %1673 = vmatprep.mubr.bf16.mxu0 %v357
        %1674 = vmatmul.mubr.bf16.gmra.mrb[0].mxu0 %v356
        %v1675 = vpop.f32.mrb[0].mxu0
        %v1676 = vadd.f32 %v599, %v1675
        %v1677 = vpop.f32.mrb[0].mxu0
        %v1678 = vadd.f32 %v603, %v1677
        %v1679 = vpop.f32.mrb[0].mxu0
        %v1680 = vadd.f32 %v599, %v1679
        %v1681 = vpop.f32.mrb[0].mxu0
        %v1682 = vadd.f32 %v603, %v1681
        %1683 = vmatprep.mubr.bf16.mxu0 %v364
        %1684 = vmatmul.mubr.bf16.gmra.mrb[0].mxu0 %v363
        %v1685 = vpop.f32.mrb[0].mxu0
        %v1686 = vadd.f32 %v599, %v1685
        %v1687 = vpop.f32.mrb[0].mxu0
        %v1688 = vadd.f32 %v603, %v1687
        %v1689 = vpop.f32.mrb[0].mxu0
        %v1690 = vadd.f32 %v599, %v1689
        %v1691 = vpop.f32.mrb[0].mxu0
        %v1692 = vadd.f32 %v603, %v1691
        %1693 = vmatprep.mubr.bf16.mxu0 %v371
        %1694 = vmatmul.mubr.bf16.gmra.mrb[0].mxu0 %v370
        %v1695 = vpop.f32.mrb[0].mxu0
        %v1696 = vadd.f32 %v599, %v1695
        %v1697 = vpop.f32.mrb[0].mxu0
        %v1698 = vadd.f32 %v603, %v1697
        %v1699 = vpop.f32.mrb[0].mxu0
        %v1700 = vadd.f32 %v599, %v1699
        %v1701 = vpop.f32.mrb[0].mxu0
        %v1702 = vadd.f32 %v603, %v1701
        %1703 = vmatprep.mubr.bf16.mxu0 %v378
        %1704 = vmatmul.mubr.bf16.gmra.mrb[0].mxu0 %v377
        %v1705 = vpop.f32.mrb[0].mxu0
        %v1706 = vadd.f32 %v599, %v1705
        %v1707 = vpop.f32.mrb[0].mxu0
        %v1708 = vadd.f32 %v603, %v1707
        %v1709 = vpop.f32.mrb[0].mxu0
        %v1710 = vadd.f32 %v599, %v1709
        %v1711 = vpop.f32.mrb[0].mxu0
        %v1712 = vadd.f32 %v603, %v1711
        %1713 = vmatprep.mubr.bf16.mxu0 %v385
        %1714 = vmatmul.mubr.bf16.gmra.mrb[0].mxu0 %v384
        %v1715 = vpop.f32.mrb[0].mxu0
        %v1716 = vadd.f32 %v599, %v1715
        %v1717 = vpop.f32.mrb[0].mxu0
        %v1718 = vadd.f32 %v603, %v1717
        %v1719 = vpop.f32.mrb[0].mxu0
        %v1720 = vadd.f32 %v599, %v1719
        %v1721 = vpop.f32.mrb[0].mxu0
        %v1722 = vadd.f32 %v603, %v1721
        %1723 = vmatprep.mubr.bf16.mxu0 %v392
        %1724 = vmatmul.mubr.bf16.gmra.mrb[0].mxu0 %v391
        %v1725 = vpop.f32.mrb[0].mxu0
        %v1726 = vadd.f32 %v599, %v1725
        %v1727 = vpop.f32.mrb[0].mxu0
        %v1728 = vadd.f32 %v603, %v1727
        %v1729 = vpop.f32.mrb[0].mxu0
        %v1730 = vadd.f32 %v599, %v1729
        %v1731 = vpop.f32.mrb[0].mxu0
        %v1732 = vadd.f32 %v603, %v1731
        %1733 = vdwg.mxu0
        %1734 = vmatprep.subr.bf16.mxu0 %v1269
        %1735 = vmatpush1.bf16.msra.mxu0 %v1268
        %1736 = vmatprep.subr.bf16.mxu0 %v1273
        %1737 = vmatpush1.bf16.msra.mxu0 %v1272
        %1738 = vmatprep.subr.bf16.mxu0 %v1277
        %1739 = vmatpush1.bf16.msra.mxu0 %v1276
        %1740 = vmatprep.subr.bf16.mxu0 %v1281
        %1741 = vmatpush1.bf16.msra.mxu0 %v1280
        %1742 = vmatprep.subr.bf16.mxu0 %v1285
        %1743 = vmatpush1.bf16.msra.mxu0 %v1284
        %1744 = vmatprep.subr.bf16.mxu0 %v1289
        %1745 = vmatpush1.bf16.msra.mxu0 %v1288
        %1746 = vmatprep.subr.bf16.mxu0 %v1293
        %1747 = vmatpush1.bf16.msra.mxu0 %v1292
        %1748 = vmatprep.subr.bf16.mxu0 %v1297
        %1749 = vmatpush1.bf16.msra.mxu0 %v1296
        %1750 = vmatprep.subr.bf16.mxu0 %v1301
        %1751 = vmatpush1.bf16.msra.mxu0 %v1300
        %1752 = vmatprep.subr.bf16.mxu0 %v1305
        %1753 = vmatpush1.bf16.msra.mxu0 %v1304
        %1754 = vmatprep.subr.bf16.mxu0 %v1309
        %1755 = vmatpush1.bf16.msra.mxu0 %v1308
        %1756 = vmatprep.subr.bf16.mxu0 %v1313
        %1757 = vmatpush1.bf16.msra.mxu0 %v1312
        %1758 = vmatprep.subr.bf16.mxu0 %v1317
        %1759 = vmatpush1.bf16.msra.mxu0 %v1316
        %1760 = vmatprep.subr.bf16.mxu0 %v1321
        %1761 = vmatpush1.bf16.msra.mxu0 %v1320
        %1762 = vmatprep.subr.bf16.mxu0 %v1325
        %1763 = vmatpush1.bf16.msra.mxu0 %v1324
        %1764 = vmatprep.subr.bf16.mxu0 %v1329
        %1765 = vmatpush1.bf16.msra.mxu0 %v1328
        %1766 = vmatprep.mubr.bf16.mxu0 %v345
        %1767 = vmatmul.mubr.bf16.gmra.mrb[0].mxu0 %v344
        %v1768 = vpop.f32.mrb[0].mxu0
        %v1769 = vadd.f32 %v1656, %v1768
        %v1770 = vpop.f32.mrb[0].mxu0
        %v1771 = vadd.f32 %v1658, %v1770
        %v1772 = vpop.f32.mrb[0].mxu0
        %v1773 = vadd.f32 %v1660, %v1772
        %v1774 = vpop.f32.mrb[0].mxu0
        %v1775 = vadd.f32 %v1662, %v1774
        %1776 = vmatprep.mubr.bf16.mxu0 %v352
        %1777 = vmatmul.mubr.bf16.gmra.mrb[0].mxu0 %v351
        %v1778 = vpop.f32.mrb[0].mxu0
        %v1779 = vadd.f32 %v1666, %v1778
        %v1780 = vpop.f32.mrb[0].mxu0
        %v1781 = vadd.f32 %v1668, %v1780
        %v1782 = vpop.f32.mrb[0].mxu0
        %v1783 = vadd.f32 %v1670, %v1782
        %v1784 = vpop.f32.mrb[0].mxu0
        %v1785 = vadd.f32 %v1672, %v1784
        %1786 = vmatprep.mubr.bf16.mxu0 %v359
        %1787 = vmatmul.mubr.bf16.gmra.mrb[0].mxu0 %v358
        %v1788 = vpop.f32.mrb[0].mxu0
        %v1789 = vadd.f32 %v1676, %v1788
        %v1790 = vpop.f32.mrb[0].mxu0
        %v1791 = vadd.f32 %v1678, %v1790
        %v1792 = vpop.f32.mrb[0].mxu0
        %v1793 = vadd.f32 %v1680, %v1792
        %v1794 = vpop.f32.mrb[0].mxu0
        %v1795 = vadd.f32 %v1682, %v1794
        %1796 = vmatprep.mubr.bf16.mxu0 %v366
        %1797 = vmatmul.mubr.bf16.gmra.mrb[0].mxu0 %v365
        %v1798 = vpop.f32.mrb[0].mxu0
        %v1799 = vadd.f32 %v1686, %v1798
        %v1800 = vpop.f32.mrb[0].mxu0
        %v1801 = vadd.f32 %v1688, %v1800
        %v1802 = vpop.f32.mrb[0].mxu0
        %v1803 = vadd.f32 %v1690, %v1802
        %v1804 = vpop.f32.mrb[0].mxu0
        %v1805 = vadd.f32 %v1692, %v1804
        %1806 = vmatprep.mubr.bf16.mxu0 %v373
        %1807 = vmatmul.mubr.bf16.gmra.mrb[0].mxu0 %v372
        %v1808 = vpop.f32.mrb[0].mxu0
        %v1809 = vadd.f32 %v1696, %v1808
        %v1810 = vpop.f32.mrb[0].mxu0
        %v1811 = vadd.f32 %v1698, %v1810
        %v1812 = vpop.f32.mrb[0].mxu0
        %v1813 = vadd.f32 %v1700, %v1812
        %v1814 = vpop.f32.mrb[0].mxu0
        %v1815 = vadd.f32 %v1702, %v1814
        %1816 = vmatprep.mubr.bf16.mxu0 %v380
        %1817 = vmatmul.mubr.bf16.gmra.mrb[0].mxu0 %v379
        %v1818 = vpop.f32.mrb[0].mxu0
        %v1819 = vadd.f32 %v1706, %v1818
        %v1820 = vpop.f32.mrb[0].mxu0
        %v1821 = vadd.f32 %v1708, %v1820
        %v1822 = vpop.f32.mrb[0].mxu0
        %v1823 = vadd.f32 %v1710, %v1822
        %v1824 = vpop.f32.mrb[0].mxu0
        %v1825 = vadd.f32 %v1712, %v1824
        %1826 = vmatprep.mubr.bf16.mxu0 %v387
        %1827 = vmatmul.mubr.bf16.gmra.mrb[0].mxu0 %v386
        %v1828 = vpop.f32.mrb[0].mxu0
        %v1829 = vadd.f32 %v1716, %v1828
        %v1830 = vpop.f32.mrb[0].mxu0
        %v1831 = vadd.f32 %v1718, %v1830
        %v1832 = vpop.f32.mrb[0].mxu0
        %v1833 = vadd.f32 %v1720, %v1832
        %v1834 = vpop.f32.mrb[0].mxu0
        %v1835 = vadd.f32 %v1722, %v1834
        %1836 = vmatprep.mubr.bf16.mxu0 %v394
        %1837 = vmatmul.mubr.bf16.gmra.mrb[0].mxu0 %v393
        %v1838 = vpop.f32.mrb[0].mxu0
        %v1839 = vadd.f32 %v1726, %v1838
        %v1840 = vpop.f32.mrb[0].mxu0
        %v1841 = vadd.f32 %v1728, %v1840
        %v1842 = vpop.f32.mrb[0].mxu0
        %v1843 = vadd.f32 %v1730, %v1842
        %v1844 = vpop.f32.mrb[0].mxu0
        %v1845 = vadd.f32 %v1732, %v1844
        %1846 = vdwg.mxu0
        %1847 = vmatprep.subr.bf16.mxu0 %v1333
        %1848 = vmatpush1.bf16.msra.mxu0 %v1332
        %1849 = vmatprep.subr.bf16.mxu0 %v1337
        %1850 = vmatpush1.bf16.msra.mxu0 %v1336
        %1851 = vmatprep.subr.bf16.mxu0 %v1341
        %1852 = vmatpush1.bf16.msra.mxu0 %v1340
        %1853 = vmatprep.subr.bf16.mxu0 %v1345
        %1854 = vmatpush1.bf16.msra.mxu0 %v1344
        %1855 = vmatprep.subr.bf16.mxu0 %v1349
        %1856 = vmatpush1.bf16.msra.mxu0 %v1348
        %1857 = vmatprep.subr.bf16.mxu0 %v1353
        %1858 = vmatpush1.bf16.msra.mxu0 %v1352
        %1859 = vmatprep.subr.bf16.mxu0 %v1357
        %1860 = vmatpush1.bf16.msra.mxu0 %v1356
        %1861 = vmatprep.subr.bf16.mxu0 %v1361
        %1862 = vmatpush1.bf16.msra.mxu0 %v1360
        %1863 = vmatprep.subr.bf16.mxu0 %v1365
        %1864 = vmatpush1.bf16.msra.mxu0 %v1364
        %1865 = vmatprep.subr.bf16.mxu0 %v1369
        %1866 = vmatpush1.bf16.msra.mxu0 %v1368
        %1867 = vmatprep.subr.bf16.mxu0 %v1373
        %1868 = vmatpush1.bf16.msra.mxu0 %v1372
        %1869 = vmatprep.subr.bf16.mxu0 %v1377
        %1870 = vmatpush1.bf16.msra.mxu0 %v1376
        %1871 = vmatprep.subr.bf16.mxu0 %v1381
        %1872 = vmatpush1.bf16.msra.mxu0 %v1380
        %1873 = vmatprep.subr.bf16.mxu0 %v1385
        %1874 = vmatpush1.bf16.msra.mxu0 %v1384
        %1875 = vmatprep.subr.bf16.mxu0 %v1389
        %1876 = vmatpush1.bf16.msra.mxu0 %v1388
        %1877 = vmatprep.subr.bf16.mxu0 %v1393
        %1878 = vmatpush1.bf16.msra.mxu0 %v1392
        %1879 = vmatprep.mubr.bf16.mxu0 %v347
        %1880 = vmatmul.mubr.bf16.gmra.mrb[0].mxu0 %v346
        %v1881 = vpop.f32.mrb[0].mxu0
        %v1882 = vadd.f32 %v1769, %v1881
        %v1883 = vpop.f32.mrb[0].mxu0
        %v1884 = vadd.f32 %v1771, %v1883
        %v1885 = vpop.f32.mrb[0].mxu0
        %v1886 = vadd.f32 %v1773, %v1885
        %v1887 = vpop.f32.mrb[0].mxu0
        %v1888 = vadd.f32 %v1775, %v1887
        %1889 = vmatprep.mubr.bf16.mxu0 %v354
        %1890 = vmatmul.mubr.bf16.gmra.mrb[0].mxu0 %v353
        %v1891 = vpop.f32.mrb[0].mxu0
        %v1892 = vadd.f32 %v1779, %v1891
        %v1893 = vpop.f32.mrb[0].mxu0
        %v1894 = vadd.f32 %v1781, %v1893
        %v1895 = vpop.f32.mrb[0].mxu0
        %v1896 = vadd.f32 %v1783, %v1895
        %v1897 = vpop.f32.mrb[0].mxu0
        %v1898 = vadd.f32 %v1785, %v1897
        %1899 = vmatprep.mubr.bf16.mxu0 %v361
        %1900 = vmatmul.mubr.bf16.gmra.mrb[0].mxu0 %v360
        %v1901 = vpop.f32.mrb[0].mxu0
        %v1902 = vadd.f32 %v1789, %v1901
        %v1903 = vpop.f32.mrb[0].mxu0
        %v1904 = vadd.f32 %v1791, %v1903
        %v1905 = vpop.f32.mrb[0].mxu0
        %v1906 = vadd.f32 %v1793, %v1905
        %v1907 = vpop.f32.mrb[0].mxu0
        %v1908 = vadd.f32 %v1795, %v1907
        %1909 = vmatprep.mubr.bf16.mxu0 %v368
        %1910 = vmatmul.mubr.bf16.gmra.mrb[0].mxu0 %v367
        %v1911 = vpop.f32.mrb[0].mxu0
        %v1912 = vadd.f32 %v1799, %v1911
        %v1913 = vpop.f32.mrb[0].mxu0
        %v1914 = vadd.f32 %v1801, %v1913
        %v1915 = vpop.f32.mrb[0].mxu0
        %v1916 = vadd.f32 %v1803, %v1915
        %v1917 = vpop.f32.mrb[0].mxu0
        %v1918 = vadd.f32 %v1805, %v1917
        %1919 = vmatprep.mubr.bf16.mxu0 %v375
        %1920 = vmatmul.mubr.bf16.gmra.mrb[0].mxu0 %v374
        %v1921 = vpop.f32.mrb[0].mxu0
        %v1922 = vadd.f32 %v1809, %v1921
        %v1923 = vpop.f32.mrb[0].mxu0
        %v1924 = vadd.f32 %v1811, %v1923
        %v1925 = vpop.f32.mrb[0].mxu0
        %v1926 = vadd.f32 %v1813, %v1925
        %v1927 = vpop.f32.mrb[0].mxu0
        %v1928 = vadd.f32 %v1815, %v1927
        %1929 = vmatprep.mubr.bf16.mxu0 %v382
        %1930 = vmatmul.mubr.bf16.gmra.mrb[0].mxu0 %v381
        %v1931 = vpop.f32.mrb[0].mxu0
        %v1932 = vadd.f32 %v1819, %v1931
        %v1933 = vpop.f32.mrb[0].mxu0
        %v1934 = vadd.f32 %v1821, %v1933
        %v1935 = vpop.f32.mrb[0].mxu0
        %v1936 = vadd.f32 %v1823, %v1935
        %v1937 = vpop.f32.mrb[0].mxu0
        %v1938 = vadd.f32 %v1825, %v1937
        %1939 = vmatprep.mubr.bf16.mxu0 %v389
        %1940 = vmatmul.mubr.bf16.gmra.mrb[0].mxu0 %v388
        %v1941 = vpop.f32.mrb[0].mxu0
        %v1942 = vadd.f32 %v1829, %v1941
        %v1943 = vpop.f32.mrb[0].mxu0
        %v1944 = vadd.f32 %v1831, %v1943
        %v1945 = vpop.f32.mrb[0].mxu0
        %v1946 = vadd.f32 %v1833, %v1945
        %v1947 = vpop.f32.mrb[0].mxu0
        %v1948 = vadd.f32 %v1835, %v1947
        %1949 = vmatprep.mubr.bf16.mxu0 %v396
        %1950 = vmatmul.mubr.bf16.gmra.mrb[0].mxu0 %v395
        %v1951 = vpop.f32.mrb[0].mxu0
        %v1952 = vadd.f32 %v1839, %v1951
        %v1953 = vpop.f32.mrb[0].mxu0
        %v1954 = vadd.f32 %v1841, %v1953
        %v1955 = vpop.f32.mrb[0].mxu0
        %v1956 = vadd.f32 %v1843, %v1955
        %v1957 = vpop.f32.mrb[0].mxu0
        %v1958 = vadd.f32 %v1845, %v1957
        %1959 = vdwg.mxu0
        %1960 = vmatprep.subr.bf16.mxu0 %v1397
        %1961 = vmatpush1.bf16.msra.mxu0 %v1396
        %1962 = vmatprep.subr.bf16.mxu0 0
        %1963 = vmatpush1.bf16.msra.mxu0 0
        %1964 = vmatprep.subr.bf16.mxu0 0
        %1965 = vmatpush1.bf16.msra.mxu0 0
        %1966 = vmatprep.subr.bf16.mxu0 0
        %1967 = vmatpush1.bf16.msra.mxu0 0
        %1968 = vmatprep.subr.bf16.mxu0 0
        %1969 = vmatpush1.bf16.msra.mxu0 0
        %1970 = vmatprep.subr.bf16.mxu0 0
        %1971 = vmatpush1.bf16.msra.mxu0 0
        %1972 = vmatprep.subr.bf16.mxu0 0
        %1973 = vmatpush1.bf16.msra.mxu0 0
        %1974 = vmatprep.subr.bf16.mxu0 0
        %1975 = vmatpush1.bf16.msra.mxu0 0
        %1976 = vmatprep.subr.bf16.mxu0 0
        %1977 = vmatpush1.bf16.msra.mxu0 0
        %1978 = vmatprep.subr.bf16.mxu0 0
        %1979 = vmatpush1.bf16.msra.mxu0 0
        %1980 = vmatprep.subr.bf16.mxu0 0
        %1981 = vmatpush1.bf16.msra.mxu0 0
        %1982 = vmatprep.subr.bf16.mxu0 0
        %1983 = vmatpush1.bf16.msra.mxu0 0
        %1984 = vmatprep.subr.bf16.mxu0 0
        %1985 = vmatpush1.bf16.msra.mxu0 0
        %1986 = vmatprep.subr.bf16.mxu0 0
        %1987 = vmatpush1.bf16.msra.mxu0 0
        %1988 = vmatprep.subr.bf16.mxu0 0
        %1989 = vmatpush1.bf16.msra.mxu0 0
        %1990 = vmatprep.subr.bf16.mxu0 0
        %1991 = vmatpush1.bf16.msra.mxu0 0
        %1992 = vmatprep.mubr.bf16.mxu0 0
        %1993 = vmatmul.mubr.bf16.gmra.mrb[0].mxu0 %v1598
        %v1994 = vpop.f32.mrb[0].mxu0
        %v1995 = vadd.f32 %v1882, %v1994
        %v1996 = vpop.f32.mrb[0].mxu0
        %v1997 = vadd.f32 %v1884, %v1996
        %v1998 = vpop.f32.mrb[0].mxu0
        %v1999 = vadd.f32 %v1886, %v1998
        %v2000 = vpop.f32.mrb[0].mxu0
        %v2001 = vadd.f32 %v1888, %v2000
        %2002 = vmatprep.mubr.bf16.mxu0 0
        %2003 = vmatmul.mubr.bf16.gmra.mrb[0].mxu0 %v1601
        %v2004 = vpop.f32.mrb[0].mxu0
        %v2005 = vadd.f32 %v1892, %v2004
        %v2006 = vpop.f32.mrb[0].mxu0
        %v2007 = vadd.f32 %v1894, %v2006
        %v2008 = vpop.f32.mrb[0].mxu0
        %v2009 = vadd.f32 %v1896, %v2008
        %v2010 = vpop.f32.mrb[0].mxu0
        %v2011 = vadd.f32 %v1898, %v2010
        %2012 = vmatprep.mubr.bf16.mxu0 0
        %2013 = vmatmul.mubr.bf16.gmra.mrb[0].mxu0 %v1604
        %v2014 = vpop.f32.mrb[0].mxu0
        %v2015 = vadd.f32 %v1902, %v2014
        %v2016 = vpop.f32.mrb[0].mxu0
        %v2017 = vadd.f32 %v1904, %v2016
        %v2018 = vpop.f32.mrb[0].mxu0
        %v2019 = vadd.f32 %v1906, %v2018
        %v2020 = vpop.f32.mrb[0].mxu0
        %v2021 = vadd.f32 %v1908, %v2020
        %2022 = vmatprep.mubr.bf16.mxu0 0
        %2023 = vmatmul.mubr.bf16.gmra.mrb[0].mxu0 %v1607
        %v2024 = vpop.f32.mrb[0].mxu0
        %v2025 = vadd.f32 %v1912, %v2024
        %v2026 = vpop.f32.mrb[0].mxu0
        %v2027 = vadd.f32 %v1914, %v2026
        %v2028 = vpop.f32.mrb[0].mxu0
        %v2029 = vadd.f32 %v1916, %v2028
        %v2030 = vpop.f32.mrb[0].mxu0
        %v2031 = vadd.f32 %v1918, %v2030
        %2032 = vmatprep.mubr.bf16.mxu0 0
        %2033 = vmatmul.mubr.bf16.gmra.mrb[0].mxu0 %v1610
        %v2034 = vpop.f32.mrb[0].mxu0
        %v2035 = vadd.f32 %v1922, %v2034
        %v2036 = vpop.f32.mrb[0].mxu0
        %v2037 = vadd.f32 %v1924, %v2036
        %v2038 = vpop.f32.mrb[0].mxu0
        %v2039 = vadd.f32 %v1926, %v2038
        %v2040 = vpop.f32.mrb[0].mxu0
        %v2041 = vadd.f32 %v1928, %v2040
        %2042 = vmatprep.mubr.bf16.mxu0 0
        %2043 = vmatmul.mubr.bf16.gmra.mrb[0].mxu0 %v1613
        %v2044 = vpop.f32.mrb[0].mxu0
        %v2045 = vadd.f32 %v1932, %v2044
        %v2046 = vpop.f32.mrb[0].mxu0
        %v2047 = vadd.f32 %v1934, %v2046
        %v2048 = vpop.f32.mrb[0].mxu0
        %v2049 = vadd.f32 %v1936, %v2048
        %v2050 = vpop.f32.mrb[0].mxu0
        %v2051 = vadd.f32 %v1938, %v2050
        %2052 = vmatprep.mubr.bf16.mxu0 0
        %2053 = vmatmul.mubr.bf16.gmra.mrb[0].mxu0 %v1616
        %v2054 = vpop.f32.mrb[0].mxu0
        %v2055 = vadd.f32 %v1942, %v2054
        %v2056 = vpop.f32.mrb[0].mxu0
        %v2057 = vadd.f32 %v1944, %v2056
        %v2058 = vpop.f32.mrb[0].mxu0
        %v2059 = vadd.f32 %v1946, %v2058
        %v2060 = vpop.f32.mrb[0].mxu0
        %v2061 = vadd.f32 %v1948, %v2060
        %2062 = vmatprep.mubr.bf16.mxu0 0
        %2063 = vmatmul.mubr.bf16.gmra.mrb[0].mxu0 %v1619
        %v2064 = vpop.f32.mrb[0].mxu0
        %v2065 = vadd.f32 %v1952, %v2064
        %v2066 = vpop.f32.mrb[0].mxu0
        %v2067 = vadd.f32 %v1954, %v2066
        %v2068 = vpop.f32.mrb[0].mxu0
        %v2069 = vadd.f32 %v1956, %v2068
        %v2070 = vpop.f32.mrb[0].mxu0
        %v2071 = vadd.f32 %v1958, %v2070
        %2072 = vdwg.mxu0
        %2073 = vmatprep.subr.bf16.mxu0 %v1207
        %2074 = vmatpush1.bf16.msra.mxu0 %v1206
        %2075 = vmatprep.subr.bf16.mxu0 %v1211
        %2076 = vmatpush1.bf16.msra.mxu0 %v1210
        %2077 = vmatprep.subr.bf16.mxu0 %v1215
        %2078 = vmatpush1.bf16.msra.mxu0 %v1214
        %2079 = vmatprep.subr.bf16.mxu0 %v1219
        %2080 = vmatpush1.bf16.msra.mxu0 %v1218
        %2081 = vmatprep.subr.bf16.mxu0 %v1223
        %2082 = vmatpush1.bf16.msra.mxu0 %v1222
        %2083 = vmatprep.subr.bf16.mxu0 %v1227
        %2084 = vmatpush1.bf16.msra.mxu0 %v1226
        %2085 = vmatprep.subr.bf16.mxu0 %v1231
        %2086 = vmatpush1.bf16.msra.mxu0 %v1230
        %2087 = vmatprep.subr.bf16.mxu0 %v1235
        %2088 = vmatpush1.bf16.msra.mxu0 %v1234
        %2089 = vmatprep.subr.bf16.mxu0 %v1239
        %2090 = vmatpush1.bf16.msra.mxu0 %v1238
        %2091 = vmatprep.subr.bf16.mxu0 %v1243
        %2092 = vmatpush1.bf16.msra.mxu0 %v1242
        %2093 = vmatprep.subr.bf16.mxu0 %v1247
        %2094 = vmatpush1.bf16.msra.mxu0 %v1246
        %2095 = vmatprep.subr.bf16.mxu0 %v1251
        %2096 = vmatpush1.bf16.msra.mxu0 %v1250
        %2097 = vmatprep.subr.bf16.mxu0 %v1255
        %2098 = vmatpush1.bf16.msra.mxu0 %v1254
        %2099 = vmatprep.subr.bf16.mxu0 %v1259
        %2100 = vmatpush1.bf16.msra.mxu0 %v1258
        %2101 = vmatprep.subr.bf16.mxu0 %v1263
        %2102 = vmatpush1.bf16.msra.mxu0 %v1262
        %2103 = vmatprep.subr.bf16.mxu0 %v1267
        %2104 = vmatpush1.bf16.msra.mxu0 %v1266
        %2105 = vmatprep.mubr.bf16.mxu0 %v343
        %2106 = vmatmul.mubr.bf16.gmra.mrb[0].mxu0 %v342
        %v2107 = vpop.f32.mrb[0].mxu0
        %v2108 = vadd.f32 %v607, %v2107
        %v2109 = vpop.f32.mrb[0].mxu0
        %v2110 = vadd.f32 %v611, %v2109
        %v2111 = vpop.f32.mrb[0].mxu0
        %v2112 = vadd.f32 %v607, %v2111
        %v2113 = vpop.f32.mrb[0].mxu0
        %v2114 = vadd.f32 %v611, %v2113
        %2115 = vmatprep.mubr.bf16.mxu0 %v350
        %2116 = vmatmul.mubr.bf16.gmra.mrb[0].mxu0 %v349
        %v2117 = vpop.f32.mrb[0].mxu0
        %v2118 = vadd.f32 %v607, %v2117
        %v2119 = vpop.f32.mrb[0].mxu0
        %v2120 = vadd.f32 %v611, %v2119
        %v2121 = vpop.f32.mrb[0].mxu0
        %v2122 = vadd.f32 %v607, %v2121
        %v2123 = vpop.f32.mrb[0].mxu0
        %v2124 = vadd.f32 %v611, %v2123
        %2125 = vmatprep.mubr.bf16.mxu0 %v357
        %2126 = vmatmul.mubr.bf16.gmra.mrb[0].mxu0 %v356
        %v2127 = vpop.f32.mrb[0].mxu0
        %v2128 = vadd.f32 %v607, %v2127
        %v2129 = vpop.f32.mrb[0].mxu0
        %v2130 = vadd.f32 %v611, %v2129
        %v2131 = vpop.f32.mrb[0].mxu0
        %v2132 = vadd.f32 %v607, %v2131
        %v2133 = vpop.f32.mrb[0].mxu0
        %v2134 = vadd.f32 %v611, %v2133
        %2135 = vmatprep.mubr.bf16.mxu0 %v364
        %2136 = vmatmul.mubr.bf16.gmra.mrb[0].mxu0 %v363
        %v2137 = vpop.f32.mrb[0].mxu0
        %v2138 = vadd.f32 %v607, %v2137
        %v2139 = vpop.f32.mrb[0].mxu0
        %v2140 = vadd.f32 %v611, %v2139
        %v2141 = vpop.f32.mrb[0].mxu0
        %v2142 = vadd.f32 %v607, %v2141
        %v2143 = vpop.f32.mrb[0].mxu0
        %v2144 = vadd.f32 %v611, %v2143
        %2145 = vmatprep.mubr.bf16.mxu0 %v371
        %2146 = vmatmul.mubr.bf16.gmra.mrb[0].mxu0 %v370
        %v2147 = vpop.f32.mrb[0].mxu0
        %v2148 = vadd.f32 %v607, %v2147
        %v2149 = vpop.f32.mrb[0].mxu0
        %v2150 = vadd.f32 %v611, %v2149
        %v2151 = vpop.f32.mrb[0].mxu0
        %v2152 = vadd.f32 %v607, %v2151
        %v2153 = vpop.f32.mrb[0].mxu0
        %v2154 = vadd.f32 %v611, %v2153
        %2155 = vmatprep.mubr.bf16.mxu0 %v378
        %2156 = vmatmul.mubr.bf16.gmra.mrb[0].mxu0 %v377
        %v2157 = vpop.f32.mrb[0].mxu0
        %v2158 = vadd.f32 %v607, %v2157
        %v2159 = vpop.f32.mrb[0].mxu0
        %v2160 = vadd.f32 %v611, %v2159
        %v2161 = vpop.f32.mrb[0].mxu0
        %v2162 = vadd.f32 %v607, %v2161
        %v2163 = vpop.f32.mrb[0].mxu0
        %v2164 = vadd.f32 %v611, %v2163
        %2165 = vmatprep.mubr.bf16.mxu0 %v385
        %2166 = vmatmul.mubr.bf16.gmra.mrb[0].mxu0 %v384
        %v2167 = vpop.f32.mrb[0].mxu0
        %v2168 = vadd.f32 %v607, %v2167
        %v2169 = vpop.f32.mrb[0].mxu0
        %v2170 = vadd.f32 %v611, %v2169
        %v2171 = vpop.f32.mrb[0].mxu0
        %v2172 = vadd.f32 %v607, %v2171
        %v2173 = vpop.f32.mrb[0].mxu0
        %v2174 = vadd.f32 %v611, %v2173
        %2175 = vmatprep.mubr.bf16.mxu0 %v392
        %2176 = vmatmul.mubr.bf16.gmra.mrb[0].mxu0 %v391
        %v2177 = vpop.f32.mrb[0].mxu0
        %v2178 = vadd.f32 %v607, %v2177
        %v2179 = vpop.f32.mrb[0].mxu0
        %v2180 = vadd.f32 %v611, %v2179
        %v2181 = vpop.f32.mrb[0].mxu0
        %v2182 = vadd.f32 %v607, %v2181
        %v2183 = vpop.f32.mrb[0].mxu0
        %v2184 = vadd.f32 %v611, %v2183
        %2185 = vdwg.mxu0
        %2186 = vmatprep.subr.bf16.mxu0 %v1271
        %2187 = vmatpush1.bf16.msra.mxu0 %v1270
        %2188 = vmatprep.subr.bf16.mxu0 %v1275
        %2189 = vmatpush1.bf16.msra.mxu0 %v1274
        %2190 = vmatprep.subr.bf16.mxu0 %v1279
        %2191 = vmatpush1.bf16.msra.mxu0 %v1278
        %2192 = vmatprep.subr.bf16.mxu0 %v1283
        %2193 = vmatpush1.bf16.msra.mxu0 %v1282
        %2194 = vmatprep.subr.bf16.mxu0 %v1287
        %2195 = vmatpush1.bf16.msra.mxu0 %v1286
        %2196 = vmatprep.subr.bf16.mxu0 %v1291
        %2197 = vmatpush1.bf16.msra.mxu0 %v1290
        %2198 = vmatprep.subr.bf16.mxu0 %v1295
        %2199 = vmatpush1.bf16.msra.mxu0 %v1294
        %2200 = vmatprep.subr.bf16.mxu0 %v1299
        %2201 = vmatpush1.bf16.msra.mxu0 %v1298
        %2202 = vmatprep.subr.bf16.mxu0 %v1303
        %2203 = vmatpush1.bf16.msra.mxu0 %v1302
        %2204 = vmatprep.subr.bf16.mxu0 %v1307
        %2205 = vmatpush1.bf16.msra.mxu0 %v1306
        %2206 = vmatprep.subr.bf16.mxu0 %v1311
        %2207 = vmatpush1.bf16.msra.mxu0 %v1310
        %2208 = vmatprep.subr.bf16.mxu0 %v1315
        %2209 = vmatpush1.bf16.msra.mxu0 %v1314
        %2210 = vmatprep.subr.bf16.mxu0 %v1319
        %2211 = vmatpush1.bf16.msra.mxu0 %v1318
        %2212 = vmatprep.subr.bf16.mxu0 %v1323
        %2213 = vmatpush1.bf16.msra.mxu0 %v1322
        %2214 = vmatprep.subr.bf16.mxu0 %v1327
        %2215 = vmatpush1.bf16.msra.mxu0 %v1326
        %2216 = vmatprep.subr.bf16.mxu0 %v1331
        %2217 = vmatpush1.bf16.msra.mxu0 %v1330
        %2218 = vmatprep.mubr.bf16.mxu0 %v345
        %2219 = vmatmul.mubr.bf16.gmra.mrb[0].mxu0 %v344
        %v2220 = vpop.f32.mrb[0].mxu0
        %v2221 = vadd.f32 %v2108, %v2220
        %v2222 = vpop.f32.mrb[0].mxu0
        %v2223 = vadd.f32 %v2110, %v2222
        %v2224 = vpop.f32.mrb[0].mxu0
        %v2225 = vadd.f32 %v2112, %v2224
        %v2226 = vpop.f32.mrb[0].mxu0
        %v2227 = vadd.f32 %v2114, %v2226
        %2228 = vmatprep.mubr.bf16.mxu0 %v352
        %2229 = vmatmul.mubr.bf16.gmra.mrb[0].mxu0 %v351
        %v2230 = vpop.f32.mrb[0].mxu0
        %v2231 = vadd.f32 %v2118, %v2230
        %v2232 = vpop.f32.mrb[0].mxu0
        %v2233 = vadd.f32 %v2120, %v2232
        %v2234 = vpop.f32.mrb[0].mxu0
        %v2235 = vadd.f32 %v2122, %v2234
        %v2236 = vpop.f32.mrb[0].mxu0
        %v2237 = vadd.f32 %v2124, %v2236
        %2238 = vmatprep.mubr.bf16.mxu0 %v359
        %2239 = vmatmul.mubr.bf16.gmra.mrb[0].mxu0 %v358
        %v2240 = vpop.f32.mrb[0].mxu0
        %v2241 = vadd.f32 %v2128, %v2240
        %v2242 = vpop.f32.mrb[0].mxu0
        %v2243 = vadd.f32 %v2130, %v2242
        %v2244 = vpop.f32.mrb[0].mxu0
        %v2245 = vadd.f32 %v2132, %v2244
        %v2246 = vpop.f32.mrb[0].mxu0
        %v2247 = vadd.f32 %v2134, %v2246
        %2248 = vmatprep.mubr.bf16.mxu0 %v366
        %2249 = vmatmul.mubr.bf16.gmra.mrb[0].mxu0 %v365
        %v2250 = vpop.f32.mrb[0].mxu0
        %v2251 = vadd.f32 %v2138, %v2250
        %v2252 = vpop.f32.mrb[0].mxu0
        %v2253 = vadd.f32 %v2140, %v2252
        %v2254 = vpop.f32.mrb[0].mxu0
        %v2255 = vadd.f32 %v2142, %v2254
        %v2256 = vpop.f32.mrb[0].mxu0
        %v2257 = vadd.f32 %v2144, %v2256
        %2258 = vmatprep.mubr.bf16.mxu0 %v373
        %2259 = vmatmul.mubr.bf16.gmra.mrb[0].mxu0 %v372
        %v2260 = vpop.f32.mrb[0].mxu0
        %v2261 = vadd.f32 %v2148, %v2260
        %v2262 = vpop.f32.mrb[0].mxu0
        %v2263 = vadd.f32 %v2150, %v2262
        %v2264 = vpop.f32.mrb[0].mxu0
        %v2265 = vadd.f32 %v2152, %v2264
        %v2266 = vpop.f32.mrb[0].mxu0
        %v2267 = vadd.f32 %v2154, %v2266
        %2268 = vmatprep.mubr.bf16.mxu0 %v380
        %2269 = vmatmul.mubr.bf16.gmra.mrb[0].mxu0 %v379
        %v2270 = vpop.f32.mrb[0].mxu0
        %v2271 = vadd.f32 %v2158, %v2270
        %v2272 = vpop.f32.mrb[0].mxu0
        %v2273 = vadd.f32 %v2160, %v2272
        %v2274 = vpop.f32.mrb[0].mxu0
        %v2275 = vadd.f32 %v2162, %v2274
        %v2276 = vpop.f32.mrb[0].mxu0
        %v2277 = vadd.f32 %v2164, %v2276
        %2278 = vmatprep.mubr.bf16.mxu0 %v387
        %2279 = vmatmul.mubr.bf16.gmra.mrb[0].mxu0 %v386
        %v2280 = vpop.f32.mrb[0].mxu0
        %v2281 = vadd.f32 %v2168, %v2280
        %v2282 = vpop.f32.mrb[0].mxu0
        %v2283 = vadd.f32 %v2170, %v2282
        %v2284 = vpop.f32.mrb[0].mxu0
        %v2285 = vadd.f32 %v2172, %v2284
        %v2286 = vpop.f32.mrb[0].mxu0
        %v2287 = vadd.f32 %v2174, %v2286
        %2288 = vmatprep.mubr.bf16.mxu0 %v394
        %2289 = vmatmul.mubr.bf16.gmra.mrb[0].mxu0 %v393
        %v2290 = vpop.f32.mrb[0].mxu0
        %v2291 = vadd.f32 %v2178, %v2290
        %v2292 = vpop.f32.mrb[0].mxu0
        %v2293 = vadd.f32 %v2180, %v2292
        %v2294 = vpop.f32.mrb[0].mxu0
        %v2295 = vadd.f32 %v2182, %v2294
        %v2296 = vpop.f32.mrb[0].mxu0
        %v2297 = vadd.f32 %v2184, %v2296
        %2298 = vdwg.mxu0
        %2299 = vmatprep.subr.bf16.mxu0 %v1335
        %2300 = vmatpush1.bf16.msra.mxu0 %v1334
        %2301 = vmatprep.subr.bf16.mxu0 %v1339
        %2302 = vmatpush1.bf16.msra.mxu0 %v1338
        %2303 = vmatprep.subr.bf16.mxu0 %v1343
        %2304 = vmatpush1.bf16.msra.mxu0 %v1342
        %2305 = vmatprep.subr.bf16.mxu0 %v1347
        %2306 = vmatpush1.bf16.msra.mxu0 %v1346
        %2307 = vmatprep.subr.bf16.mxu0 %v1351
        %2308 = vmatpush1.bf16.msra.mxu0 %v1350
        %2309 = vmatprep.subr.bf16.mxu0 %v1355
        %2310 = vmatpush1.bf16.msra.mxu0 %v1354
        %2311 = vmatprep.subr.bf16.mxu0 %v1359
        %2312 = vmatpush1.bf16.msra.mxu0 %v1358
        %2313 = vmatprep.subr.bf16.mxu0 %v1363
        %2314 = vmatpush1.bf16.msra.mxu0 %v1362
        %2315 = vmatprep.subr.bf16.mxu0 %v1367
        %2316 = vmatpush1.bf16.msra.mxu0 %v1366
        %2317 = vmatprep.subr.bf16.mxu0 %v1371
        %2318 = vmatpush1.bf16.msra.mxu0 %v1370
        %2319 = vmatprep.subr.bf16.mxu0 %v1375
        %2320 = vmatpush1.bf16.msra.mxu0 %v1374
        %2321 = vmatprep.subr.bf16.mxu0 %v1379
        %2322 = vmatpush1.bf16.msra.mxu0 %v1378
        %2323 = vmatprep.subr.bf16.mxu0 %v1383
        %2324 = vmatpush1.bf16.msra.mxu0 %v1382
        %2325 = vmatprep.subr.bf16.mxu0 %v1387
        %2326 = vmatpush1.bf16.msra.mxu0 %v1386
        %2327 = vmatprep.subr.bf16.mxu0 %v1391
        %2328 = vmatpush1.bf16.msra.mxu0 %v1390
        %2329 = vmatprep.subr.bf16.mxu0 %v1395
        %2330 = vmatpush1.bf16.msra.mxu0 %v1394
        %2331 = vmatprep.mubr.bf16.mxu0 %v347
        %2332 = vmatmul.mubr.bf16.gmra.mrb[0].mxu0 %v346
        %v2333 = vpop.f32.mrb[0].mxu0
        %v2334 = vadd.f32 %v2221, %v2333
        %v2335 = vpop.f32.mrb[0].mxu0
        %v2336 = vadd.f32 %v2223, %v2335
        %v2337 = vpop.f32.mrb[0].mxu0
        %v2338 = vadd.f32 %v2225, %v2337
        %v2339 = vpop.f32.mrb[0].mxu0
        %v2340 = vadd.f32 %v2227, %v2339
        %2341 = vmatprep.mubr.bf16.mxu0 %v354
        %2342 = vmatmul.mubr.bf16.gmra.mrb[0].mxu0 %v353
        %v2343 = vpop.f32.mrb[0].mxu0
        %v2344 = vadd.f32 %v2231, %v2343
        %v2345 = vpop.f32.mrb[0].mxu0
        %v2346 = vadd.f32 %v2233, %v2345
        %v2347 = vpop.f32.mrb[0].mxu0
        %v2348 = vadd.f32 %v2235, %v2347
        %v2349 = vpop.f32.mrb[0].mxu0
        %v2350 = vadd.f32 %v2237, %v2349
        %2351 = vmatprep.mubr.bf16.mxu0 %v361
        %2352 = vmatmul.mubr.bf16.gmra.mrb[0].mxu0 %v360
        %v2353 = vpop.f32.mrb[0].mxu0
        %v2354 = vadd.f32 %v2241, %v2353
        %v2355 = vpop.f32.mrb[0].mxu0
        %v2356 = vadd.f32 %v2243, %v2355
        %v2357 = vpop.f32.mrb[0].mxu0
        %v2358 = vadd.f32 %v2245, %v2357
        %v2359 = vpop.f32.mrb[0].mxu0
        %v2360 = vadd.f32 %v2247, %v2359
        %2361 = vmatprep.mubr.bf16.mxu0 %v368
        %2362 = vmatmul.mubr.bf16.gmra.mrb[0].mxu0 %v367
        %v2363 = vpop.f32.mrb[0].mxu0
        %v2364 = vadd.f32 %v2251, %v2363
        %v2365 = vpop.f32.mrb[0].mxu0
        %v2366 = vadd.f32 %v2253, %v2365
        %v2367 = vpop.f32.mrb[0].mxu0
        %v2368 = vadd.f32 %v2255, %v2367
        %v2369 = vpop.f32.mrb[0].mxu0
        %v2370 = vadd.f32 %v2257, %v2369
        %2371 = vmatprep.mubr.bf16.mxu0 %v375
        %2372 = vmatmul.mubr.bf16.gmra.mrb[0].mxu0 %v374
        %v2373 = vpop.f32.mrb[0].mxu0
        %v2374 = vadd.f32 %v2261, %v2373
        %v2375 = vpop.f32.mrb[0].mxu0
        %v2376 = vadd.f32 %v2263, %v2375
        %v2377 = vpop.f32.mrb[0].mxu0
        %v2378 = vadd.f32 %v2265, %v2377
        %v2379 = vpop.f32.mrb[0].mxu0
        %v2380 = vadd.f32 %v2267, %v2379
        %2381 = vmatprep.mubr.bf16.mxu0 %v382
        %2382 = vmatmul.mubr.bf16.gmra.mrb[0].mxu0 %v381
        %v2383 = vpop.f32.mrb[0].mxu0
        %v2384 = vadd.f32 %v2271, %v2383
        %v2385 = vpop.f32.mrb[0].mxu0
        %v2386 = vadd.f32 %v2273, %v2385
        %v2387 = vpop.f32.mrb[0].mxu0
        %v2388 = vadd.f32 %v2275, %v2387
        %v2389 = vpop.f32.mrb[0].mxu0
        %v2390 = vadd.f32 %v2277, %v2389
        %2391 = vmatprep.mubr.bf16.mxu0 %v389
        %2392 = vmatmul.mubr.bf16.gmra.mrb[0].mxu0 %v388
        %v2393 = vpop.f32.mrb[0].mxu0
        %v2394 = vadd.f32 %v2281, %v2393
        %v2395 = vpop.f32.mrb[0].mxu0
        %v2396 = vadd.f32 %v2283, %v2395
        %v2397 = vpop.f32.mrb[0].mxu0
        %v2398 = vadd.f32 %v2285, %v2397
        %v2399 = vpop.f32.mrb[0].mxu0
        %v2400 = vadd.f32 %v2287, %v2399
        %2401 = vmatprep.mubr.bf16.mxu0 %v396
        %2402 = vmatmul.mubr.bf16.gmra.mrb[0].mxu0 %v395
        %v2403 = vpop.f32.mrb[0].mxu0
        %v2404 = vadd.f32 %v2291, %v2403
        %v2405 = vpop.f32.mrb[0].mxu0
        %v2406 = vadd.f32 %v2293, %v2405
        %v2407 = vpop.f32.mrb[0].mxu0
        %v2408 = vadd.f32 %v2295, %v2407
        %v2409 = vpop.f32.mrb[0].mxu0
        %v2410 = vadd.f32 %v2297, %v2409
        %2411 = vdwg.mxu0
        %2412 = vmatprep.subr.bf16.mxu0 %v1399
        %2413 = vmatpush1.bf16.msra.mxu0 %v1398
        %2414 = vmatprep.subr.bf16.mxu0 0
        %2415 = vmatpush1.bf16.msra.mxu0 0
        %2416 = vmatprep.subr.bf16.mxu0 0
        %2417 = vmatpush1.bf16.msra.mxu0 0
        %2418 = vmatprep.subr.bf16.mxu0 0
        %2419 = vmatpush1.bf16.msra.mxu0 0
        %2420 = vmatprep.subr.bf16.mxu0 0
        %2421 = vmatpush1.bf16.msra.mxu0 0
        %2422 = vmatprep.subr.bf16.mxu0 0
        %2423 = vmatpush1.bf16.msra.mxu0 0
        %2424 = vmatprep.subr.bf16.mxu0 0
        %2425 = vmatpush1.bf16.msra.mxu0 0
        %2426 = vmatprep.subr.bf16.mxu0 0
        %2427 = vmatpush1.bf16.msra.mxu0 0
        %2428 = vmatprep.subr.bf16.mxu0 0
        %2429 = vmatpush1.bf16.msra.mxu0 0
        %2430 = vmatprep.subr.bf16.mxu0 0
        %2431 = vmatpush1.bf16.msra.mxu0 0
        %2432 = vmatprep.subr.bf16.mxu0 0
        %2433 = vmatpush1.bf16.msra.mxu0 0
        %2434 = vmatprep.subr.bf16.mxu0 0
        %2435 = vmatpush1.bf16.msra.mxu0 0
        %2436 = vmatprep.subr.bf16.mxu0 0
        %2437 = vmatpush1.bf16.msra.mxu0 0
        %2438 = vmatprep.subr.bf16.mxu0 0
        %2439 = vmatpush1.bf16.msra.mxu0 0
        %2440 = vmatprep.subr.bf16.mxu0 0
        %2441 = vmatpush1.bf16.msra.mxu0 0
        %2442 = vmatprep.subr.bf16.mxu0 0
        %2443 = vmatpush1.bf16.msra.mxu0 0
        %2444 = vmatprep.mubr.bf16.mxu0 0
        %2445 = vmatmul.mubr.bf16.gmra.mrb[0].mxu0 %v1598
        %v2446 = vpop.f32.mrb[0].mxu0
        %v2447 = vadd.f32 %v2334, %v2446
        %v2448 = vpop.f32.mrb[0].mxu0
        %v2449 = vadd.f32 %v2336, %v2448
        %v2450 = vpop.f32.mrb[0].mxu0
        %v2451 = vadd.f32 %v2338, %v2450
        %v2452 = vpop.f32.mrb[0].mxu0
        %v2453 = vadd.f32 %v2340, %v2452
        %2454 = vmatprep.mubr.bf16.mxu0 0
        %2455 = vmatmul.mubr.bf16.gmra.mrb[0].mxu0 %v1601
        %v2456 = vpop.f32.mrb[0].mxu0
        %v2457 = vadd.f32 %v2344, %v2456
        %v2458 = vpop.f32.mrb[0].mxu0
        %v2459 = vadd.f32 %v2346, %v2458
        %v2460 = vpop.f32.mrb[0].mxu0
        %v2461 = vadd.f32 %v2348, %v2460
        %v2462 = vpop.f32.mrb[0].mxu0
        %v2463 = vadd.f32 %v2350, %v2462
        %2464 = vmatprep.mubr.bf16.mxu0 0
        %2465 = vmatmul.mubr.bf16.gmra.mrb[0].mxu0 %v1604
        %v2466 = vpop.f32.mrb[0].mxu0
        %v2467 = vadd.f32 %v2354, %v2466
        %v2468 = vpop.f32.mrb[0].mxu0
        %v2469 = vadd.f32 %v2356, %v2468
        %v2470 = vpop.f32.mrb[0].mxu0
        %v2471 = vadd.f32 %v2358, %v2470
        %v2472 = vpop.f32.mrb[0].mxu0
        %v2473 = vadd.f32 %v2360, %v2472
        %2474 = vmatprep.mubr.bf16.mxu0 0
        %2475 = vmatmul.mubr.bf16.gmra.mrb[0].mxu0 %v1607
        %v2476 = vpop.f32.mrb[0].mxu0
        %v2477 = vadd.f32 %v2364, %v2476
        %v2478 = vpop.f32.mrb[0].mxu0
        %v2479 = vadd.f32 %v2366, %v2478
        %v2480 = vpop.f32.mrb[0].mxu0
        %v2481 = vadd.f32 %v2368, %v2480
        %v2482 = vpop.f32.mrb[0].mxu0
        %v2483 = vadd.f32 %v2370, %v2482
        %2484 = vmatprep.mubr.bf16.mxu0 0
        %2485 = vmatmul.mubr.bf16.gmra.mrb[0].mxu0 %v1610
        %v2486 = vpop.f32.mrb[0].mxu0
        %v2487 = vadd.f32 %v2374, %v2486
        %v2488 = vpop.f32.mrb[0].mxu0
        %v2489 = vadd.f32 %v2376, %v2488
        %v2490 = vpop.f32.mrb[0].mxu0
        %v2491 = vadd.f32 %v2378, %v2490
        %v2492 = vpop.f32.mrb[0].mxu0
        %v2493 = vadd.f32 %v2380, %v2492
        %2494 = vmatprep.mubr.bf16.mxu0 0
        %2495 = vmatmul.mubr.bf16.gmra.mrb[0].mxu0 %v1613
        %v2496 = vpop.f32.mrb[0].mxu0
        %v2497 = vadd.f32 %v2384, %v2496
        %v2498 = vpop.f32.mrb[0].mxu0
        %v2499 = vadd.f32 %v2386, %v2498
        %v2500 = vpop.f32.mrb[0].mxu0
        %v2501 = vadd.f32 %v2388, %v2500
        %v2502 = vpop.f32.mrb[0].mxu0
        %v2503 = vadd.f32 %v2390, %v2502
        %2504 = vmatprep.mubr.bf16.mxu0 0
        %2505 = vmatmul.mubr.bf16.gmra.mrb[0].mxu0 %v1616
        %v2506 = vpop.f32.mrb[0].mxu0
        %v2507 = vadd.f32 %v2394, %v2506
        %v2508 = vpop.f32.mrb[0].mxu0
        %v2509 = vadd.f32 %v2396, %v2508
        %v2510 = vpop.f32.mrb[0].mxu0
        %v2511 = vadd.f32 %v2398, %v2510
        %v2512 = vpop.f32.mrb[0].mxu0
        %v2513 = vadd.f32 %v2400, %v2512
        %2514 = vmatprep.mubr.bf16.mxu0 0
        %2515 = vmatmul.mubr.bf16.gmra.mrb[0].mxu0 %v1619
        %v2516 = vpop.f32.mrb[0].mxu0
        %v2517 = vadd.f32 %v2404, %v2516
        %v2518 = vpop.f32.mrb[0].mxu0
        %v2519 = vadd.f32 %v2406, %v2518
        %v2520 = vpop.f32.mrb[0].mxu0
        %v2521 = vadd.f32 %v2408, %v2520
        %v2522 = vpop.f32.mrb[0].mxu0
        %v2523 = vadd.f32 %v2410, %v2522
        %2524 = vdwg.mxu0
        %v2525 = vmax.f32 %v1995, 0.0
        %v2526 = vmax.f32 %v1997, 0.0
        %v2527 = vmax.f32 %v2447, 0.0
        %v2528 = vmax.f32 %v2449, 0.0
        %v2529 = vmax.f32 %v1999, 0.0
        %v2530 = vmax.f32 %v2001, 0.0
        %v2531 = vmax.f32 %v2451, 0.0
        %v2532 = vmax.f32 %v2453, 0.0
        %v2533 = vmax.f32 %v2005, 0.0
        %v2534 = vmax.f32 %v2007, 0.0
        %v2535 = vmax.f32 %v2457, 0.0
        %v2536 = vmax.f32 %v2459, 0.0
        %v2537 = vmax.f32 %v2009, 0.0
        %v2538 = vmax.f32 %v2011, 0.0
        %v2539 = vmax.f32 %v2461, 0.0
        %v2540 = vmax.f32 %v2463, 0.0
        %v2541 = vmax.f32 %v2015, 0.0
        %v2542 = vmax.f32 %v2017, 0.0
        %v2543 = vmax.f32 %v2467, 0.0
        %v2544 = vmax.f32 %v2469, 0.0
        %v2545 = vmax.f32 %v2019, 0.0
        %v2546 = vmax.f32 %v2021, 0.0
        %v2547 = vmax.f32 %v2471, 0.0
        %v2548 = vmax.f32 %v2473, 0.0
        %v2549 = vmax.f32 %v2025, 0.0
        %v2550 = vmax.f32 %v2027, 0.0
        %v2551 = vmax.f32 %v2477, 0.0
        %v2552 = vmax.f32 %v2479, 0.0
        %v2553 = vmax.f32 %v2029, 0.0
        %v2554 = vmax.f32 %v2031, 0.0
        %v2555 = vmax.f32 %v2481, 0.0
        %v2556 = vmax.f32 %v2483, 0.0
        %v2557 = vmax.f32 %v2035, 0.0
        %v2558 = vmax.f32 %v2037, 0.0
        %v2559 = vmax.f32 %v2487, 0.0
        %v2560 = vmax.f32 %v2489, 0.0
        %v2561 = vmax.f32 %v2039, 0.0
        %v2562 = vmax.f32 %v2041, 0.0
        %v2563 = vmax.f32 %v2491, 0.0
        %v2564 = vmax.f32 %v2493, 0.0
        %v2565 = vmax.f32 %v2045, 0.0
        %v2566 = vmax.f32 %v2047, 0.0
        %v2567 = vmax.f32 %v2497, 0.0
        %v2568 = vmax.f32 %v2499, 0.0
        %v2569 = vmax.f32 %v2049, 0.0
        %v2570 = vmax.f32 %v2051, 0.0
        %v2571 = vmax.f32 %v2501, 0.0
        %v2572 = vmax.f32 %v2503, 0.0
        %v2573 = vmax.f32 %v2055, 0.0
        %v2574 = vmax.f32 %v2057, 0.0
        %v2575 = vmax.f32 %v2507, 0.0
        %v2576 = vmax.f32 %v2509, 0.0
        %v2577 = vmax.f32 %v2059, 0.0
        %v2578 = vmax.f32 %v2061, 0.0
        %v2579 = vmax.f32 %v2511, 0.0
        %v2580 = vmax.f32 %v2513, 0.0
        %v2581 = vmax.f32 %v2065, 0.0
        %v2582 = vmax.f32 %v2067, 0.0
        %v2583 = vmax.f32 %v2517, 0.0
        %v2584 = vmax.f32 %v2519, 0.0
        %v2585 = vmax.f32 %v2069, 0.0
        %v2586 = vmax.f32 %v2071, 0.0
        %v2587 = vmax.f32 %v2521, 0.0
        %v2588 = vmax.f32 %v2523, 0.0
        %v2589 = vpack.c.bf16 %v2529, %v2525
        %v2590 = vpack.c.bf16 %v2530, %v2526
        %v2591 = vpack.c.bf16 %v2531, %v2527
        %v2592 = vpack.c.bf16 %v2532, %v2528
        %v2593 = vpack.c.bf16 %v2537, %v2533
        %v2594 = vpack.c.bf16 %v2538, %v2534
        %v2595 = vpack.c.bf16 %v2539, %v2535
        %v2596 = vpack.c.bf16 %v2540, %v2536
        %v2597 = vpack.c.bf16 %v2545, %v2541
        %v2598 = vpack.c.bf16 %v2546, %v2542
        %v2599 = vpack.c.bf16 %v2547, %v2543
        %v2600 = vpack.c.bf16 %v2548, %v2544
        %v2601 = vpack.c.bf16 %v2553, %v2549
        %v2602 = vpack.c.bf16 %v2554, %v2550
        %v2603 = vpack.c.bf16 %v2555, %v2551
        %v2604 = vpack.c.bf16 %v2556, %v2552
        %v2605 = vpack.c.bf16 %v2561, %v2557
        %v2606 = vpack.c.bf16 %v2562, %v2558
        %v2607 = vpack.c.bf16 %v2563, %v2559
        %v2608 = vpack.c.bf16 %v2564, %v2560
        %v2609 = vpack.c.bf16 %v2569, %v2565
        %v2610 = vpack.c.bf16 %v2570, %v2566
        %v2611 = vpack.c.bf16 %v2571, %v2567
        %v2612 = vpack.c.bf16 %v2572, %v2568
        %v2613 = vpack.c.bf16 %v2577, %v2573
        %v2614 = vpack.c.bf16 %v2578, %v2574
        %v2615 = vpack.c.bf16 %v2579, %v2575
        %v2616 = vpack.c.bf16 %v2580, %v2576
        %v2617 = vpack.c.bf16 %v2585, %v2581
        %v2618 = vpack.c.bf16 %v2586, %v2582
        %v2619 = vpack.c.bf16 %v2587, %v2583
        %v2620 = vpack.c.bf16 %v2588, %v2584
        %v2621 = vld [vmem:[%s3] sm:$0xf]
        %v2622 = vld [vmem:[%s3 + $0x4] sm:$0xf]
        %v2623 = vld [vmem:[%s3 + $0x8] sm:$0xf]
        %v2624 = vld [vmem:[%s3 + $0xc] sm:$0xf]
        %v2625 = vld [vmem:[%s3 + $0x10] sm:$0xf]
        %v2626 = vld [vmem:[%s3 + $0x14] sm:$0xf]
        %v2627 = vld [vmem:[%s3 + $0x18] sm:$0xf]
        %v2628 = vld [vmem:[%s3 + $0x1c] sm:$0xf]
        %v2629 = vld [vmem:[%s3 + $0x20] sm:$0xf]
        %v2630 = vld [vmem:[%s3 + $0x24] sm:$0xf]
        %v2631 = vld [vmem:[%s3 + $0x28] sm:$0xf]
        %v2632 = vld [vmem:[%s3 + $0x2c] sm:$0xf]
        %v2633 = vld [vmem:[%s3 + $0x30] sm:$0xf]
        %v2634 = vld [vmem:[%s3 + $0x34] sm:$0xf]
        %v2635 = vld [vmem:[%s3 + $0x38] sm:$0xf]
        %v2636 = vld [vmem:[%s3 + $0x3c] sm:$0xf]
        %v2637 = vld [vmem:[%s3 + $0x40] sm:$0xf]
        %v2638 = vld [vmem:[%s3 + $0x44] sm:$0xf]
        %v2639 = vld [vmem:[%s3 + $0x48] sm:$0xf]
        %v2640 = vld [vmem:[%s3 + $0x4c] sm:$0xf]
        %v2641 = vld [vmem:[%s3 + $0x50] sm:$0xf]
        %v2642 = vld [vmem:[%s3 + $0x54] sm:$0xf]
        %v2643 = vld [vmem:[%s3 + $0x58] sm:$0xf]
        %v2644 = vld [vmem:[%s3 + $0x5c] sm:$0xf]
        %v2645 = vld [vmem:[%s3 + $0x60] sm:$0xf]
        %v2646 = vld [vmem:[%s3 + $0x64] sm:$0xf]
        %v2647 = vld [vmem:[%s3 + $0x68] sm:$0xf]
        %v2648 = vld [vmem:[%s3 + $0x6c] sm:$0xf]
        %v2649 = vld [vmem:[%s3 + $0x70] sm:$0xf]
        %v2650 = vld [vmem:[%s3 + $0x74] sm:$0xf]
        %v2651 = vld [vmem:[%s3 + $0x78] sm:$0xf]
        %v2652 = vld [vmem:[%s3 + $0x7c] sm:$0xf]
        %v2653 = vld [vmem:[%s3 + $0x80] sm:$0xf]
        %v2654 = vld [vmem:[%s3 + $0x84] sm:$0xf]
        %v2655 = vld [vmem:[%s3 + $0x88] sm:$0xf]
        %v2656 = vld [vmem:[%s3 + $0x8c] sm:$0xf]
        %v2657 = vld [vmem:[%s3 + $0x90] sm:$0xf]
        %v2658 = vld [vmem:[%s3 + $0x94] sm:$0xf]
        %v2659 = vld [vmem:[%s3 + $0x98] sm:$0xf]
        %v2660 = vld [vmem:[%s3 + $0x9c] sm:$0xf]
        %v2661 = vld [vmem:[%s3 + $0xa0] sm:$0xf]
        %v2662 = vld [vmem:[%s3 + $0xa4] sm:$0xf]
        %v2663 = vld [vmem:[%s3 + $0xa8] sm:$0xf]
        %v2664 = vld [vmem:[%s3 + $0xac] sm:$0xf]
        %v2665 = vld [vmem:[%s3 + $0xb0] sm:$0xf]
        %v2666 = vld [vmem:[%s3 + $0xb4] sm:$0xf]
        %v2667 = vld [vmem:[%s3 + $0xb8] sm:$0xf]
        %v2668 = vld [vmem:[%s3 + $0xbc] sm:$0xf]
        %v2669 = vld [vmem:[%s3 + $0xc0] sm:$0xf]
        %v2670 = vld [vmem:[%s3 + $0xc4] sm:$0xf]
        %v2671 = vld [vmem:[%s3 + $0xc8] sm:$0xf]
        %v2672 = vld [vmem:[%s3 + $0xcc] sm:$0xf]
        %v2673 = vld [vmem:[%s3 + $0xd0] sm:$0xf]
        %v2674 = vld [vmem:[%s3 + $0xd4] sm:$0xf]
        %v2675 = vld [vmem:[%s3 + $0xd8] sm:$0xf]
        %v2676 = vld [vmem:[%s3 + $0xdc] sm:$0xf]
        %v2677 = vld [vmem:[%s3 + $0xe0] sm:$0xf]
        %v2678 = vld [vmem:[%s3 + $0xe4] sm:$0xf]
        %v2679 = vld [vmem:[%s3 + $0xe8] sm:$0xf]
        %v2680 = vld [vmem:[%s3 + $0xec] sm:$0xf]
        %v2681 = vld [vmem:[%s3 + $0xf0] sm:$0xf]
        %v2682 = vld [vmem:[%s3 + $0xf4] sm:$0xf]
        %v2683 = vld [vmem:[%s3 + $0xf8] sm:$0xf]
        %v2684 = vld [vmem:[%s3 + $0xfc] sm:$0xf]
        %v2685 = vld [vmem:[%s4] sm:$0x1]
        %v2687 = vlaneseq
        %v2688 = vshrl.u32 %v2687, 7
        %v2689 = vsub.s32 0, %v2688
        %v2690 = vrot.slane %v2685, %v2689
        %v2756 = vunpack.c.l.b16 %v2621
        %v2757 = vunpack.c.l.b16 %v2622
        %v2758 = vunpack.c.l.b16 %v2623
        %v2759 = vunpack.c.l.b16 %v2624
        %v2760 = vunpack.c.l.b16 %v2625
        %v2761 = vunpack.c.l.b16 %v2626
        %v2762 = vunpack.c.l.b16 %v2627
        %v2763 = vunpack.c.l.b16 %v2628
        %v2764 = vunpack.c.l.b16 %v2629
        %v2765 = vunpack.c.l.b16 %v2630
        %v2766 = vunpack.c.l.b16 %v2631
        %v2767 = vunpack.c.l.b16 %v2632
        %v2768 = vunpack.c.l.b16 %v2633
        %v2769 = vunpack.c.l.b16 %v2634
        %v2770 = vunpack.c.l.b16 %v2635
        %v2771 = vunpack.c.l.b16 %v2636
        %v2772 = vunpack.c.l.b16 %v2637
        %v2773 = vunpack.c.l.b16 %v2638
        %v2774 = vunpack.c.l.b16 %v2639
        %v2775 = vunpack.c.l.b16 %v2640
        %v2776 = vunpack.c.l.b16 %v2641
        %v2777 = vunpack.c.l.b16 %v2642
        %v2778 = vunpack.c.l.b16 %v2643
        %v2779 = vunpack.c.l.b16 %v2644
        %v2780 = vunpack.c.l.b16 %v2645
        %v2781 = vunpack.c.l.b16 %v2646
        %v2782 = vunpack.c.l.b16 %v2647
        %v2783 = vunpack.c.l.b16 %v2648
        %v2784 = vunpack.c.l.b16 %v2649
        %v2785 = vunpack.c.l.b16 %v2650
        %v2786 = vunpack.c.l.b16 %v2651
        %v2787 = vunpack.c.l.b16 %v2652
        %v2788 = vunpack.c.l.b16 %v2653
        %v2789 = vunpack.c.l.b16 %v2654
        %v2790 = vunpack.c.l.b16 %v2655
        %v2791 = vunpack.c.l.b16 %v2656
        %v2792 = vunpack.c.l.b16 %v2657
        %v2793 = vunpack.c.l.b16 %v2658
        %v2794 = vunpack.c.l.b16 %v2659
        %v2795 = vunpack.c.l.b16 %v2660
        %v2796 = vunpack.c.l.b16 %v2661
        %v2797 = vunpack.c.l.b16 %v2662
        %v2798 = vunpack.c.l.b16 %v2663
        %v2799 = vunpack.c.l.b16 %v2664
        %v2800 = vunpack.c.l.b16 %v2665
        %v2801 = vunpack.c.l.b16 %v2666
        %v2802 = vunpack.c.l.b16 %v2667
        %v2803 = vunpack.c.l.b16 %v2668
        %v2804 = vunpack.c.l.b16 %v2669
        %v2805 = vunpack.c.l.b16 %v2670
        %v2806 = vunpack.c.l.b16 %v2671
        %v2807 = vunpack.c.l.b16 %v2672
        %v2808 = vunpack.c.l.b16 %v2673
        %v2809 = vunpack.c.l.b16 %v2674
        %v2810 = vunpack.c.l.b16 %v2675
        %v2811 = vunpack.c.l.b16 %v2676
        %v2812 = vunpack.c.l.b16 %v2677
        %v2813 = vunpack.c.l.b16 %v2678
        %v2814 = vunpack.c.l.b16 %v2679
        %v2815 = vunpack.c.l.b16 %v2680
        %v2816 = vunpack.c.l.b16 %v2681
        %v2817 = vunpack.c.l.b16 %v2682
        %v2818 = vunpack.c.l.b16 %v2683
        %v2819 = vunpack.c.l.b16 %v2684
        %v2820 = vpack.c.b16 %v2757, %v2756
        %v2821 = vpack.c.b16 %v2759, %v2758
        %v2822 = vpack.c.b16 %v2761, %v2760
        %v2823 = vpack.c.b16 %v2763, %v2762
        %v2824 = vpack.c.b16 %v2765, %v2764
        %v2825 = vpack.c.b16 %v2767, %v2766
        %v2826 = vpack.c.b16 %v2769, %v2768
        %v2827 = vpack.c.b16 %v2771, %v2770
        %v2828 = vpack.c.b16 %v2773, %v2772
        %v2829 = vpack.c.b16 %v2775, %v2774
        %v2830 = vpack.c.b16 %v2777, %v2776
        %v2831 = vpack.c.b16 %v2779, %v2778
        %v2832 = vpack.c.b16 %v2781, %v2780
        %v2833 = vpack.c.b16 %v2783, %v2782
        %v2834 = vpack.c.b16 %v2785, %v2784
        %v2835 = vpack.c.b16 %v2787, %v2786
        %v2836 = vpack.c.b16 %v2789, %v2788
        %v2837 = vpack.c.b16 %v2791, %v2790
        %v2838 = vpack.c.b16 %v2793, %v2792
        %v2839 = vpack.c.b16 %v2795, %v2794
        %v2840 = vpack.c.b16 %v2797, %v2796
        %v2841 = vpack.c.b16 %v2799, %v2798
        %v2842 = vpack.c.b16 %v2801, %v2800
        %v2843 = vpack.c.b16 %v2803, %v2802
        %v2844 = vpack.c.b16 %v2805, %v2804
        %v2845 = vpack.c.b16 %v2807, %v2806
        %v2846 = vpack.c.b16 %v2809, %v2808
        %v2847 = vpack.c.b16 %v2811, %v2810
        %v2848 = vpack.c.b16 %v2813, %v2812
        %v2849 = vpack.c.b16 %v2815, %v2814
        %v2850 = vpack.c.b16 %v2817, %v2816
        %v2851 = vpack.c.b16 %v2819, %v2818
        %2884 = vmatprep.subr.bf16.mxu0 0
        %2885 = vmatpush1.bf16.msra.mxu0 %v2820
        %2886 = vmatprep.subr.bf16.mxu0 0
        %2887 = vmatpush1.bf16.msra.mxu0 %v2821
        %2888 = vmatprep.subr.bf16.mxu0 0
        %2889 = vmatpush1.bf16.msra.mxu0 %v2822
        %2890 = vmatprep.subr.bf16.mxu0 0
        %2891 = vmatpush1.bf16.msra.mxu0 %v2823
        %2892 = vmatprep.subr.bf16.mxu0 0
        %2893 = vmatpush1.bf16.msra.mxu0 %v2824
        %2894 = vmatprep.subr.bf16.mxu0 0
        %2895 = vmatpush1.bf16.msra.mxu0 %v2825
        %2896 = vmatprep.subr.bf16.mxu0 0
        %2897 = vmatpush1.bf16.msra.mxu0 %v2826
        %2898 = vmatprep.subr.bf16.mxu0 0
        %2899 = vmatpush1.bf16.msra.mxu0 %v2827
        %2900 = vmatprep.subr.bf16.mxu0 0
        %2901 = vmatpush1.bf16.msra.mxu0 %v2828
        %2902 = vmatprep.subr.bf16.mxu0 0
        %2903 = vmatpush1.bf16.msra.mxu0 %v2829
        %2904 = vmatprep.subr.bf16.mxu0 0
        %2905 = vmatpush1.bf16.msra.mxu0 %v2830
        %2906 = vmatprep.subr.bf16.mxu0 0
        %2907 = vmatpush1.bf16.msra.mxu0 %v2831
        %2908 = vmatprep.subr.bf16.mxu0 0
        %2909 = vmatpush1.bf16.msra.mxu0 %v2832
        %2910 = vmatprep.subr.bf16.mxu0 0
        %2911 = vmatpush1.bf16.msra.mxu0 %v2833
        %2912 = vmatprep.subr.bf16.mxu0 0
        %2913 = vmatpush1.bf16.msra.mxu0 %v2834
        %2914 = vmatprep.subr.bf16.mxu0 0
        %2915 = vmatpush1.bf16.msra.mxu0 %v2835
        %2916 = vmatprep.mubr.bf16.mxu0 %v2590
        %2917 = vmatmul.mubr.bf16.gmra.mrb[0].mxu0 %v2589
        %v2918 = vpop.f32.mrb[0].mxu0
        %v2919 = vadd.f32 %v2690, %v2918
        %v2920 = vpop.f32.mrb[0].mxu0
        %v2921 = vpop.f32.mrb[0].mxu0
        %v2922 = vadd.f32 %v2690, %v2921
        %v2923 = vpop.f32.mrb[0].mxu0
        %2924 = vmatprep.mubr.bf16.mxu0 %v2594
        %2925 = vmatmul.mubr.bf16.gmra.mrb[0].mxu0 %v2593
        %v2926 = vpop.f32.mrb[0].mxu0
        %v2927 = vadd.f32 %v2690, %v2926
        %v2928 = vpop.f32.mrb[0].mxu0
        %v2929 = vpop.f32.mrb[0].mxu0
        %v2930 = vadd.f32 %v2690, %v2929
        %v2931 = vpop.f32.mrb[0].mxu0
        %2932 = vmatprep.mubr.bf16.mxu0 %v2598
        %2933 = vmatmul.mubr.bf16.gmra.mrb[0].mxu0 %v2597
        %v2934 = vpop.f32.mrb[0].mxu0
        %v2935 = vadd.f32 %v2690, %v2934
        %v2936 = vpop.f32.mrb[0].mxu0
        %v2937 = vpop.f32.mrb[0].mxu0
        %v2938 = vadd.f32 %v2690, %v2937
        %v2939 = vpop.f32.mrb[0].mxu0
        %2940 = vmatprep.mubr.bf16.mxu0 %v2602
        %2941 = vmatmul.mubr.bf16.gmra.mrb[0].mxu0 %v2601
        %v2942 = vpop.f32.mrb[0].mxu0
        %v2943 = vadd.f32 %v2690, %v2942
        %v2944 = vpop.f32.mrb[0].mxu0
        %v2945 = vpop.f32.mrb[0].mxu0
        %v2946 = vadd.f32 %v2690, %v2945
        %v2947 = vpop.f32.mrb[0].mxu0
        %2948 = vmatprep.mubr.bf16.mxu0 %v2606
        %2949 = vmatmul.mubr.bf16.gmra.mrb[0].mxu0 %v2605
        %v2950 = vpop.f32.mrb[0].mxu0
        %v2951 = vadd.f32 %v2690, %v2950
        %v2952 = vpop.f32.mrb[0].mxu0
        %v2953 = vpop.f32.mrb[0].mxu0
        %v2954 = vadd.f32 %v2690, %v2953
        %v2955 = vpop.f32.mrb[0].mxu0
        %2956 = vmatprep.mubr.bf16.mxu0 %v2610
        %2957 = vmatmul.mubr.bf16.gmra.mrb[0].mxu0 %v2609
        %v2958 = vpop.f32.mrb[0].mxu0
        %v2959 = vadd.f32 %v2690, %v2958
        %v2960 = vpop.f32.mrb[0].mxu0
        %v2961 = vpop.f32.mrb[0].mxu0
        %v2962 = vadd.f32 %v2690, %v2961
        %v2963 = vpop.f32.mrb[0].mxu0
        %2964 = vmatprep.mubr.bf16.mxu0 %v2614
        %2965 = vmatmul.mubr.bf16.gmra.mrb[0].mxu0 %v2613
        %v2966 = vpop.f32.mrb[0].mxu0
        %v2967 = vadd.f32 %v2690, %v2966
        %v2968 = vpop.f32.mrb[0].mxu0
        %v2969 = vpop.f32.mrb[0].mxu0
        %v2970 = vadd.f32 %v2690, %v2969
        %v2971 = vpop.f32.mrb[0].mxu0
        %2972 = vmatprep.mubr.bf16.mxu0 %v2618
        %2973 = vmatmul.mubr.bf16.gmra.mrb[0].mxu0 %v2617
        %v2974 = vpop.f32.mrb[0].mxu0
        %v2975 = vadd.f32 %v2690, %v2974
        %v2976 = vpop.f32.mrb[0].mxu0
        %v2977 = vpop.f32.mrb[0].mxu0
        %v2978 = vadd.f32 %v2690, %v2977
        %v2979 = vpop.f32.mrb[0].mxu0
        %2980 = vdwg.mxu0
        %2981 = vmatprep.subr.bf16.mxu0 0
        %2982 = vmatpush1.bf16.msra.mxu0 %v2836
        %2983 = vmatprep.subr.bf16.mxu0 0
        %2984 = vmatpush1.bf16.msra.mxu0 %v2837
        %2985 = vmatprep.subr.bf16.mxu0 0
        %2986 = vmatpush1.bf16.msra.mxu0 %v2838
        %2987 = vmatprep.subr.bf16.mxu0 0
        %2988 = vmatpush1.bf16.msra.mxu0 %v2839
        %2989 = vmatprep.subr.bf16.mxu0 0
        %2990 = vmatpush1.bf16.msra.mxu0 %v2840
        %2991 = vmatprep.subr.bf16.mxu0 0
        %2992 = vmatpush1.bf16.msra.mxu0 %v2841
        %2993 = vmatprep.subr.bf16.mxu0 0
        %2994 = vmatpush1.bf16.msra.mxu0 %v2842
        %2995 = vmatprep.subr.bf16.mxu0 0
        %2996 = vmatpush1.bf16.msra.mxu0 %v2843
        %2997 = vmatprep.subr.bf16.mxu0 0
        %2998 = vmatpush1.bf16.msra.mxu0 %v2844
        %2999 = vmatprep.subr.bf16.mxu0 0
        %3000 = vmatpush1.bf16.msra.mxu0 %v2845
        %3001 = vmatprep.subr.bf16.mxu0 0
        %3002 = vmatpush1.bf16.msra.mxu0 %v2846
        %3003 = vmatprep.subr.bf16.mxu0 0
        %3004 = vmatpush1.bf16.msra.mxu0 %v2847
        %3005 = vmatprep.subr.bf16.mxu0 0
        %3006 = vmatpush1.bf16.msra.mxu0 %v2848
        %3007 = vmatprep.subr.bf16.mxu0 0
        %3008 = vmatpush1.bf16.msra.mxu0 %v2849
        %3009 = vmatprep.subr.bf16.mxu0 0
        %3010 = vmatpush1.bf16.msra.mxu0 %v2850
        %3011 = vmatprep.subr.bf16.mxu0 0
        %3012 = vmatpush1.bf16.msra.mxu0 %v2851
        %3013 = vmatprep.mubr.bf16.mxu0 %v2592
        %3014 = vmatmul.mubr.bf16.gmra.mrb[0].mxu0 %v2591
        %v3015 = vpop.f32.mrb[0].mxu0
        %v3016 = vadd.f32 %v2919, %v3015
        %v3017 = vpop.f32.mrb[0].mxu0
        %v3018 = vpop.f32.mrb[0].mxu0
        %v3019 = vadd.f32 %v2922, %v3018
        %v3020 = vpop.f32.mrb[0].mxu0
        %3021 = vmatprep.mubr.bf16.mxu0 %v2596
        %3022 = vmatmul.mubr.bf16.gmra.mrb[0].mxu0 %v2595
        %v3023 = vpop.f32.mrb[0].mxu0
        %v3024 = vadd.f32 %v2927, %v3023
        %v3025 = vpop.f32.mrb[0].mxu0
        %v3026 = vpop.f32.mrb[0].mxu0
        %v3027 = vadd.f32 %v2930, %v3026
        %v3028 = vpop.f32.mrb[0].mxu0
        %3029 = vmatprep.mubr.bf16.mxu0 %v2600
        %3030 = vmatmul.mubr.bf16.gmra.mrb[0].mxu0 %v2599
        %v3031 = vpop.f32.mrb[0].mxu0
        %v3032 = vadd.f32 %v2935, %v3031
        %v3033 = vpop.f32.mrb[0].mxu0
        %v3034 = vpop.f32.mrb[0].mxu0
        %v3035 = vadd.f32 %v2938, %v3034
        %v3036 = vpop.f32.mrb[0].mxu0
        %3037 = vmatprep.mubr.bf16.mxu0 %v2604
        %3038 = vmatmul.mubr.bf16.gmra.mrb[0].mxu0 %v2603
        %v3039 = vpop.f32.mrb[0].mxu0
        %v3040 = vadd.f32 %v2943, %v3039
        %v3041 = vpop.f32.mrb[0].mxu0
        %v3042 = vpop.f32.mrb[0].mxu0
        %v3043 = vadd.f32 %v2946, %v3042
        %v3044 = vpop.f32.mrb[0].mxu0
        %3045 = vmatprep.mubr.bf16.mxu0 %v2608
        %3046 = vmatmul.mubr.bf16.gmra.mrb[0].mxu0 %v2607
        %v3047 = vpop.f32.mrb[0].mxu0
        %v3048 = vadd.f32 %v2951, %v3047
        %v3049 = vpop.f32.mrb[0].mxu0
        %v3050 = vpop.f32.mrb[0].mxu0
        %v3051 = vadd.f32 %v2954, %v3050
        %v3052 = vpop.f32.mrb[0].mxu0
        %3053 = vmatprep.mubr.bf16.mxu0 %v2612
        %3054 = vmatmul.mubr.bf16.gmra.mrb[0].mxu0 %v2611
        %v3055 = vpop.f32.mrb[0].mxu0
        %v3056 = vadd.f32 %v2959, %v3055
        %v3057 = vpop.f32.mrb[0].mxu0
        %v3058 = vpop.f32.mrb[0].mxu0
        %v3059 = vadd.f32 %v2962, %v3058
        %v3060 = vpop.f32.mrb[0].mxu0
        %3061 = vmatprep.mubr.bf16.mxu0 %v2616
        %3062 = vmatmul.mubr.bf16.gmra.mrb[0].mxu0 %v2615
        %v3063 = vpop.f32.mrb[0].mxu0
        %v3064 = vadd.f32 %v2967, %v3063
        %v3065 = vpop.f32.mrb[0].mxu0
        %v3066 = vpop.f32.mrb[0].mxu0
        %v3067 = vadd.f32 %v2970, %v3066
        %v3068 = vpop.f32.mrb[0].mxu0
        %3069 = vmatprep.mubr.bf16.mxu0 %v2620
        %3070 = vmatmul.mubr.bf16.gmra.mrb[0].mxu0 %v2619
        %v3071 = vpop.f32.mrb[0].mxu0
        %v3072 = vadd.f32 %v2975, %v3071
        %v3073 = vpop.f32.mrb[0].mxu0
        %v3074 = vpop.f32.mrb[0].mxu0
        %v3075 = vadd.f32 %v2978, %v3074
        %v3076 = vpop.f32.mrb[0].mxu0
        %3077 = vdwg.mxu0
        %3078 = vmax.xlane.f32.xlu0 %v3016
        %v3079 = vpop.xlane.xlu0 %3078
        %3080 = vmax.xlane.f32.xlu0 %v3019
        %v3081 = vpop.xlane.xlu0 %3080
        %3082 = vmax.xlane.f32.xlu0 %v3024
        %v3083 = vpop.xlane.xlu0 %3082
        %3084 = vmax.xlane.f32.xlu0 %v3027
        %v3085 = vpop.xlane.xlu0 %3084
        %3086 = vmax.xlane.f32.xlu0 %v3032
        %v3087 = vpop.xlane.xlu0 %3086
        %3088 = vmax.xlane.f32.xlu0 %v3035
        %v3089 = vpop.xlane.xlu0 %3088
        %3090 = vmax.xlane.f32.xlu0 %v3040
        %v3091 = vpop.xlane.xlu0 %3090
        %3092 = vmax.xlane.f32.xlu0 %v3043
        %v3093 = vpop.xlane.xlu0 %3092
        %3094 = vmax.xlane.f32.xlu0 %v3048
        %v3095 = vpop.xlane.xlu0 %3094
        %3096 = vmax.xlane.f32.xlu0 %v3051
        %v3097 = vpop.xlane.xlu0 %3096
        %3098 = vmax.xlane.f32.xlu0 %v3056
        %v3099 = vpop.xlane.xlu0 %3098
        %3100 = vmax.xlane.f32.xlu0 %v3059
        %v3101 = vpop.xlane.xlu0 %3100
        %3102 = vmax.xlane.f32.xlu0 %v3064
        %v3103 = vpop.xlane.xlu0 %3102
        %3104 = vmax.xlane.f32.xlu0 %v3067
        %v3105 = vpop.xlane.xlu0 %3104
        %3106 = vmax.xlane.f32.xlu0 %v3072
        %v3107 = vpop.xlane.xlu0 %3106
        %3108 = vmax.xlane.f32.xlu0 %v3075
        %v3109 = vpop.xlane.xlu0 %3108
        %v3110 = vsub.f32 %v3016, %v3079
        %v3111 = vsub.f32 %v3019, %v3081
        %v3112 = vsub.f32 %v3024, %v3083
        %v3113 = vsub.f32 %v3027, %v3085
        %v3114 = vsub.f32 %v3032, %v3087
        %v3115 = vsub.f32 %v3035, %v3089
        %v3116 = vsub.f32 %v3040, %v3091
        %v3117 = vsub.f32 %v3043, %v3093
        %v3118 = vsub.f32 %v3048, %v3095
        %v3119 = vsub.f32 %v3051, %v3097
        %v3120 = vsub.f32 %v3056, %v3099
        %v3121 = vsub.f32 %v3059, %v3101
        %v3122 = vsub.f32 %v3064, %v3103
        %v3123 = vsub.f32 %v3067, %v3105
        %v3124 = vsub.f32 %v3072, %v3107
        %v3125 = vsub.f32 %v3075, %v3109
        %v3126 = vmul.f32 %v3110, 1.442695
        %v3127 = vpow.pop %v3126
        %v3128 = vmul.f32 %v3111, 1.442695
        %v3129 = vpow.pop %v3128
        %v3130 = vmul.f32 %v3112, 1.442695
        %v3131 = vpow.pop %v3130
        %v3132 = vmul.f32 %v3113, 1.442695
        %v3133 = vpow.pop %v3132
        %v3134 = vmul.f32 %v3114, 1.442695
        %v3135 = vpow.pop %v3134
        %v3136 = vmul.f32 %v3115, 1.442695
        %v3137 = vpow.pop %v3136
        %v3138 = vmul.f32 %v3116, 1.442695
        %v3139 = vpow.pop %v3138
        %v3140 = vmul.f32 %v3117, 1.442695
        %v3141 = vpow.pop %v3140
        %v3142 = vmul.f32 %v3118, 1.442695
        %v3143 = vpow.pop %v3142
        %v3144 = vmul.f32 %v3119, 1.442695
        %v3145 = vpow.pop %v3144
        %v3146 = vmul.f32 %v3120, 1.442695
        %v3147 = vpow.pop %v3146
        %v3148 = vmul.f32 %v3121, 1.442695
        %v3149 = vpow.pop %v3148
        %v3150 = vmul.f32 %v3122, 1.442695
        %v3151 = vpow.pop %v3150
        %v3152 = vmul.f32 %v3123, 1.442695
        %v3153 = vpow.pop %v3152
        %v3154 = vmul.f32 %v3124, 1.442695
        %v3155 = vpow.pop %v3154
        %v3156 = vmul.f32 %v3125, 1.442695
        %v3157 = vpow.pop %v3156
        %3158 = vadd.xlane.f32.xlu0 %v3127
        %v3159 = vpop.xlane.xlu0 %3158
        %3160 = vadd.xlane.f32.xlu0 %v3129
        %v3161 = vpop.xlane.xlu0 %3160
        %3162 = vadd.xlane.f32.xlu0 %v3131
        %v3163 = vpop.xlane.xlu0 %3162
        %3164 = vadd.xlane.f32.xlu0 %v3133
        %v3165 = vpop.xlane.xlu0 %3164
        %3166 = vadd.xlane.f32.xlu0 %v3135
        %v3167 = vpop.xlane.xlu0 %3166
        %3168 = vadd.xlane.f32.xlu0 %v3137
        %v3169 = vpop.xlane.xlu0 %3168
        %3170 = vadd.xlane.f32.xlu0 %v3139
        %v3171 = vpop.xlane.xlu0 %3170
        %3172 = vadd.xlane.f32.xlu0 %v3141
        %v3173 = vpop.xlane.xlu0 %3172
        %3174 = vadd.xlane.f32.xlu0 %v3143
        %v3175 = vpop.xlane.xlu0 %3174
        %3176 = vadd.xlane.f32.xlu0 %v3145
        %v3177 = vpop.xlane.xlu0 %3176
        %3178 = vadd.xlane.f32.xlu0 %v3147
        %v3179 = vpop.xlane.xlu0 %3178
        %3180 = vadd.xlane.f32.xlu0 %v3149
        %v3181 = vpop.xlane.xlu0 %3180
        %3182 = vadd.xlane.f32.xlu0 %v3151
        %v3183 = vpop.xlane.xlu0 %3182
        %3184 = vadd.xlane.f32.xlu0 %v3153
        %v3185 = vpop.xlane.xlu0 %3184
        %3186 = vadd.xlane.f32.xlu0 %v3155
        %v3187 = vpop.xlane.xlu0 %3186
        %3188 = vadd.xlane.f32.xlu0 %v3157
        %v3189 = vpop.xlane.xlu0 %3188
        %v3190 = vlog2.pop %v3159
        %v3191 = vmul.f32 %v3190, 0.6931472
        %v3192 = vlog2.pop %v3161
        %v3193 = vmul.f32 %v3192, 0.6931472
        %v3194 = vlog2.pop %v3163
        %v3195 = vmul.f32 %v3194, 0.6931472
        %v3196 = vlog2.pop %v3165
        %v3197 = vmul.f32 %v3196, 0.6931472
        %v3198 = vlog2.pop %v3167
        %v3199 = vmul.f32 %v3198, 0.6931472
        %v3200 = vlog2.pop %v3169
        %v3201 = vmul.f32 %v3200, 0.6931472
        %v3202 = vlog2.pop %v3171
        %v3203 = vmul.f32 %v3202, 0.6931472
        %v3204 = vlog2.pop %v3173
        %v3205 = vmul.f32 %v3204, 0.6931472
        %v3206 = vlog2.pop %v3175
        %v3207 = vmul.f32 %v3206, 0.6931472
        %v3208 = vlog2.pop %v3177
        %v3209 = vmul.f32 %v3208, 0.6931472
        %v3210 = vlog2.pop %v3179
        %v3211 = vmul.f32 %v3210, 0.6931472
        %v3212 = vlog2.pop %v3181
        %v3213 = vmul.f32 %v3212, 0.6931472
        %v3214 = vlog2.pop %v3183
        %v3215 = vmul.f32 %v3214, 0.6931472
        %v3216 = vlog2.pop %v3185
        %v3217 = vmul.f32 %v3216, 0.6931472
        %v3218 = vlog2.pop %v3187
        %v3219 = vmul.f32 %v3218, 0.6931472
        %v3220 = vlog2.pop %v3189
        %v3221 = vmul.f32 %v3220, 0.6931472
        %v3222 = vsub.f32 %v3110, %v3191
        %v3223 = vsub.f32 %v3111, %v3193
        %v3224 = vsub.f32 %v3112, %v3195
        %v3225 = vsub.f32 %v3113, %v3197
        %v3226 = vsub.f32 %v3114, %v3199
        %v3227 = vsub.f32 %v3115, %v3201
        %v3228 = vsub.f32 %v3116, %v3203
        %v3229 = vsub.f32 %v3117, %v3205
        %v3230 = vsub.f32 %v3118, %v3207
        %v3231 = vsub.f32 %v3119, %v3209
        %v3232 = vsub.f32 %v3120, %v3211
        %v3233 = vsub.f32 %v3121, %v3213
        %v3234 = vsub.f32 %v3122, %v3215
        %v3235 = vsub.f32 %v3123, %v3217
        %v3236 = vsub.f32 %v3124, %v3219
        %v3237 = vsub.f32 %v3125, %v3221
        %3238 = vst [vmem:[%s220] sm:$0xff] %v3222
        %3239 = vst [vmem:[%s220 + $0x8] sm:$0xff] %v3223
        %3240 = vst [vmem:[%s220 + $0x10] sm:$0xff] %v3224
        %3241 = vst [vmem:[%s220 + $0x18] sm:$0xff] %v3225
        %3242 = vst [vmem:[%s220 + $0x20] sm:$0xff] %v3226
        %3243 = vst [vmem:[%s220 + $0x28] sm:$0xff] %v3227
        %3244 = vst [vmem:[%s220 + $0x30] sm:$0xff] %v3228
        %3245 = vst [vmem:[%s220 + $0x38] sm:$0xff] %v3229
        %3246 = vst [vmem:[%s220 + $0x40] sm:$0xff] %v3230
        %3247 = vst [vmem:[%s220 + $0x48] sm:$0xff] %v3231
        %3248 = vst [vmem:[%s220 + $0x50] sm:$0xff] %v3232
        %3249 = vst [vmem:[%s220 + $0x58] sm:$0xff] %v3233
        %3250 = vst [vmem:[%s220 + $0x60] sm:$0xff] %v3234
        %3251 = vst [vmem:[%s220 + $0x68] sm:$0xff] %v3235
        %3252 = vst [vmem:[%s220 + $0x70] sm:$0xff] %v3236
        %3253 = vst [vmem:[%s220 + $0x78] sm:$0xff] %v3237
        %s3254 = sand.u32 %s137, 1
        %s3255 = scalar_lea.sflag [#allocation3], %s3254
        %s3256 = sand.u32 %s137, 1
        %s3257 = smul.addr %s3256, 128
        %s3258 = scalar_lea.vmem [#allocation2], %s3257
        // Predicated region
        $region41: #{tpu_custom_call.1} parent=39 // pred_check
          %p3259 = pneg %p147
        $region42: #{tpu_custom_call.1} parent=39 // pred_check_branch
          %3261 = sbr.rel (%p3259) target = $region44
        $region43: #{tpu_custom_call.1} parent=39 // pred_region
          %s3262 = smul.u32 16, %s19
          %s3264 = ssub.s32 2048, 2048
          %3265 = vsyncadd %s3255, %s3264
          %s3266 = smul.addr %s3262, 128
          %s3267 = scalar_lea.hbm %s5, %s3266
          %s3268 = sshll.u32 %s3258, 4
          %s3269 = int_to_ptr.vmem [resolvable:$true] %s3268
          %3274 = dma.vmem_to_hbm [thread:$0]  %s3269, 2048, %s3267, %s3255, 128, 128, 8
        $region44: #{tpu_custom_call.1} parent=39 // pred_fallthru
          _
      $region40: #{tpu_custom_call.1} parent=5 // pred_fallthru
        _
      %p3275 = scmp.le.s32.totalorder 2, %s14
      // Predicated region
      $region45: #{tpu_custom_call.1} parent=5 // pred_check
        %p3276 = pneg %p3275
      $region46: #{tpu_custom_call.1} parent=5 // pred_check_branch
        %3278 = sbr.rel (%p3276) target = $region48
      $region47: #{tpu_custom_call.1} parent=5 // pred_region
        %s3279 = ssub.s32 %s14, 2
        // Predicated region
        $region49: #{tpu_custom_call.1} parent=47 // pred_check
          %p3280 = pneg %p153
        $region50: #{tpu_custom_call.1} parent=47 // pred_check_branch
          %3282 = sbr.rel (%p3280) target = $region52
        $region51: #{tpu_custom_call.1} parent=47 // pred_region
          %s3283 = sand.u32 %s138, 1
          %s3284 = scalar_lea.sflag [#allocation3], %s3283
          %s3285 = sand.u32 %s138, 1
          %s3286 = smul.addr %s3285, 128
          %s3287 = scalar_lea.vmem [#allocation2], %s3286
          %3288 = dma.done %s3284, 2048
        $region52: #{tpu_custom_call.1} parent=47 // pred_fallthru
          _
      $region48: #{tpu_custom_call.1} parent=5 // pred_fallthru
        _
    $region6: #{tpu_custom_call.1} parent=1 // loop_footer
      %s18 = sadd.s32 1, %s14
    $region7: #{tpu_custom_call.1} parent=1 // loop_footer_branch
      %13 = sbr.rel target = $region3
    $region8: #{tpu_custom_call.1} parent=1 // loop_exit
      _
    %3289 = vsyncpa [#allocation3], 1
    %s3290 = scalar_lea.sflag [#allocation3], 1
    %3291 = vsyncpa %s3290, 1

</llo_original>
